<compile_context>
chip_gen: v7x
topology: tpu7x:2x2x1
jax: 0.10.0
libtpu: 0.0.40
codegen_flags: <defaults>
</compile_context>

<pallas_src>
import functools

import jax
import jax.numpy as jnp
from jax.experimental import pallas as pl
from jax.experimental.pallas import tpu as pltpu


def _transformer_block_kernel(vkq_ref, bias_ref, wqkv_ref,
                              wo_ref, bo_ref,
                              g1_ref, beta1_ref,
                              w1_ref, b1_ref,
                              w2_ref, b2_ref,
                              g2_ref, beta2_ref,
                              out_ref,
                              *, heads, head_dim, embed_size):
    H, D, E = heads, head_dim, embed_size

    vkq = vkq_ref[...]                                    # (R, 3E), columns [v|k|q]

    # ---- fused V/K/Q projections: one (R,3E)@(3E,3E) block-diagonal matmul ----
    proj = jnp.dot(vkq, wqkv_ref[...], preferred_element_type=jnp.float32)

    # ---- split heads: H static column slices stacked on a leading batch dim ----
    def split_heads(col0):
        return jnp.stack(
            [proj[:, col0 + h * D: col0 + (h + 1) * D] for h in range(H)], axis=0)

    vh = split_heads(0)            # (H, R, D)
    kh = split_heads(E)            # (H, R, D)
    qh = split_heads(2 * E)        # (H, R, D)

    # ---- attention core: two batched dot_generals + a single softmax -----------
    scale = 1.0 / (float(E) ** 0.5)     # module uses 1/sqrt(embed_size), not head_dim
    energy = jax.lax.dot_general(       # (H, R, R): q @ k^T per head, no k transpose
        qh, kh, (((2,), (2,)), ((0,), (0,))),
        preferred_element_type=jnp.float32) * scale
    # additive bias kills cross-batch (and, if ever needed, user-masked) entries;
    # exp underflows to exactly 0 so the result matches per-batch softmax exactly.
    energy = energy + bias_ref[...][None, :, :]
    energy = energy - jnp.max(energy, axis=-1, keepdims=True)
    p = jnp.exp(energy)
    denom = jnp.sum(p, axis=-1, keepdims=True)
    attn = p * pl.reciprocal(denom, approx=False)   # exact; approx=True if tol allows
    ctx = jax.lax.dot_general(                      # (H, R, D): attn @ v per head
        attn, vh, (((2,), (1,)), ((0,), (0,))),
        preferred_element_type=jnp.float32)

    # ---- fc_out folded into the head path (no ctx scratch, no concat) ----------
    wo = wo_ref[...]                                # (E, E), pre-transposed
    attn_out = bo_ref[...]                          # (1, E) broadcasts to (R, E)
    for h in range(H):
        attn_out = attn_out + jnp.dot(
            ctx[h], wo[h * D:(h + 1) * D, :], preferred_element_type=jnp.float32)

    # ---- residual + LayerNorm 1 (dropout = identity) ---------------------------
    q_in = vkq[:, 2 * E:]                           # original query columns
    x = attn_out + q_in
    mu = jnp.mean(x, axis=-1, keepdims=True)
    var = jnp.mean((x - mu) ** 2, axis=-1, keepdims=True)
    xn = (x - mu) * jax.lax.rsqrt(var + 1e-5) * g1_ref[...] + beta1_ref[...]

    # ---- feed-forward: Linear -> ReLU -> Linear (weights pre-transposed) -------
    h1 = jnp.dot(xn, w1_ref[...], preferred_element_type=jnp.float32) + b1_ref[...]
    h1 = jnp.maximum(h1, 0.0)
    ff = jnp.dot(h1, w2_ref[...], preferred_element_type=jnp.float32) + b2_ref[...]

    # ---- residual + LayerNorm 2 (dropout = identity) ---------------------------
    y = ff + xn
    mu2 = jnp.mean(y, axis=-1, keepdims=True)
    var2 = jnp.mean((y - mu2) ** 2, axis=-1, keepdims=True)
    out_ref[...] = (y - mu2) * jax.lax.rsqrt(var2 + 1e-5) * g2_ref[...] + beta2_ref[...]


@functools.partial(jax.jit, static_argnames=("heads",))
def transformer_block(value, key, query, params, *, heads):
    N, S, E = query.shape
    D = E // heads
    R = N * S

    # ----- one-time weight prep (constant-folds / fuses under jit) -------------
    eye_h = jnp.eye(heads, dtype=jnp.float32)
    wv_bd = jnp.kron(eye_h, params["wv"].T)         # (E, E) block-diag of wv.T
    wk_bd = jnp.kron(eye_h, params["wk"].T)
    wq_bd = jnp.kron(eye_h, params["wq"].T)
    wqkv = jnp.zeros((3 * E, 3 * E), jnp.float32)   # diag(wv_bd, wk_bd, wq_bd)
    wqkv = wqkv.at[0:E, 0:E].set(wv_bd)
    wqkv = wqkv.at[E:2 * E, E:2 * E].set(wk_bd)
    wqkv = wqkv.at[2 * E:, 2 * E:].set(wq_bd)
    wo_t = params["wo"].T                           # (E, E)
    w1_t = params["w1"].T                           # (E, FE)
    w2_t = params["w2"].T                           # (FE, E)

    # fused [v|k|q] operand and cross-batch additive bias
    vkq = jnp.concatenate(
        [value.reshape(R, E), key.reshape(R, E), query.reshape(R, E)], axis=1)
    bids = jnp.arange(R, dtype=jnp.int32) // S
    attn_bias = jnp.where(bids[:, None] == bids[None, :], 0.0, -1e30
                          ).astype(jnp.float32)     # (R, R)

    kernel = functools.partial(_transformer_block_kernel,
                               heads=heads, head_dim=D, embed_size=E)

    vmem = pl.BlockSpec(memory_space=pltpu.MemorySpace.VMEM)
    args = (vkq, attn_bias, wqkv,
            wo_t, params["bo"],
            params["g1"], params["beta1"],
            w1_t, params["b1"],
            w2_t, params["b2"],
            params["g2"], params["beta2"])

    out2 = pl.pallas_call(
        kernel,
        out_shape=jax.ShapeDtypeStruct((R, E), jnp.float32),
        in_specs=[vmem] * len(args),
        out_specs=vmem,
    )(*args)

    return out2.reshape(N, S, E)


# ----------------------------- pure-JAX reference ----------------------------
def transformer_block_ref(value, key, query, p, *, heads):
    N, S, E = query.shape
    D = E // heads

    def proj(x, w):
        xh = x.reshape(N, S, heads, D)
        return jnp.einsum("nshd,od->nsho", xh, w)

    vh = proj(value, p["wv"])
    kh = proj(key, p["wk"])
    qh = proj(query, p["wq"])

    energy = jnp.einsum("nqhd,nkhd->nhqk", qh, kh)
    attn = jax.nn.softmax(energy / (E ** 0.5), axis=3)
    out = jnp.einsum("nhql,nlhd->nqhd", attn, vh).reshape(N, S, E)
    attn_out = out @ p["wo"].T + p["bo"][0]

    def layernorm(z, g, b):
        mu = jnp.mean(z, axis=-1, keepdims=True)
        var = jnp.mean((z - mu) ** 2, axis=-1, keepdims=True)
        return (z - mu) * jax.lax.rsqrt(var + 1e-5) * g[0] + b[0]

    x = layernorm(attn_out + query, p["g1"], p["beta1"])
    h1 = jnp.maximum(x @ p["w1"].T + p["b1"][0], 0.0)
    ff = h1 @ p["w2"].T + p["b2"][0]
    return layernorm(ff + x, p["g2"], p["beta2"])


if __name__ == "__main__":
    # Small shapes consistent with the module: embed_size=32, heads=4, seq=8.
    N, S, E = 2, 8, 32
    HEADS = 4
    D = E // HEADS
    FWD_EXP = 4
    FE = FWD_EXP * E

    root = jax.random.PRNGKey(0)
    keys = jax.random.split(root, 16)

    def nrm(k, shape, s=0.05):
        return jax.random.normal(k, shape, dtype=jnp.float32) * s

    params = {
        "wv": nrm(keys[0], (D, D)),
        "wk": nrm(keys[1], (D, D)),
        "wq": nrm(keys[2], (D, D)),
        "wo": nrm(keys[3], (E, E)),
        "bo": nrm(keys[4], (1, E)),
        "g1": jnp.ones((1, E), jnp.float32),      # nn.LayerNorm default weight
        "beta1": jnp.zeros((1, E), jnp.float32),  # nn.LayerNorm default bias
        "w1": nrm(keys[5], (FE, E)),
        "b1": nrm(keys[6], (1, FE)),
        "w2": nrm(keys[7], (E, FE)),
        "b2": nrm(keys[8], (1, E)),
        "g2": jnp.ones((1, E), jnp.float32),
        "beta2": jnp.zeros((1, E), jnp.float32),
    }

    value = jax.random.normal(keys[9], (N, S, E), dtype=jnp.float32)
    key_in = jax.random.normal(keys[10], (N, S, E), dtype=jnp.float32)
    query = jax.random.normal(keys[11], (N, S, E), dtype=jnp.float32)

    out = transformer_block(value, key_in, query, params, heads=HEADS)
    out = jax.block_until_ready(out)

    ref = transformer_block_ref(value, key_in, query, params, heads=HEADS)
    assert out.shape == (N, S, E)
    assert jnp.allclose(out, ref, rtol=1e-4, atol=1e-4), (
        f"max abs err {jnp.max(jnp.abs(out - ref))}")

    print("KERNEL_OK")
</pallas_src>

<mosaic_0001>
module attributes {stable_mosaic.version = 11 : i64} {
  func.func @_transformer_block_kernel(%arg0: memref<16x96xf32, #tpu.memory_space<vmem>>, %arg1: memref<16x16xf32, #tpu.memory_space<vmem>>, %arg2: memref<96x96xf32, #tpu.memory_space<vmem>>, %arg3: memref<32x32xf32, #tpu.memory_space<vmem>>, %arg4: memref<1x32xf32, #tpu.memory_space<vmem>>, %arg5: memref<1x32xf32, #tpu.memory_space<vmem>>, %arg6: memref<1x32xf32, #tpu.memory_space<vmem>>, %arg7: memref<32x128xf32, #tpu.memory_space<vmem>>, %arg8: memref<1x128xf32, #tpu.memory_space<vmem>>, %arg9: memref<128x32xf32, #tpu.memory_space<vmem>>, %arg10: memref<1x32xf32, #tpu.memory_space<vmem>>, %arg11: memref<1x32xf32, #tpu.memory_space<vmem>>, %arg12: memref<1x32xf32, #tpu.memory_space<vmem>>, %arg13: memref<16x32xf32, #tpu.memory_space<vmem>>) attributes {dimension_semantics = [], scalar_prefetch = 0 : i64, scratch_operands = 0 : i64, tpu.core_type = #tpu.core_type<tc>} {
    %c0 = arith.constant 0 : index
    %c0_0 = arith.constant 0 : index
    %0 = vector.load %arg0[%c0, %c0_0] : memref<16x96xf32, #tpu.memory_space<vmem>>, vector<16x96xf32>
    %c0_1 = arith.constant 0 : index
    %c0_2 = arith.constant 0 : index
    %1 = vector.load %arg2[%c0_1, %c0_2] : memref<96x96xf32, #tpu.memory_space<vmem>>, vector<96x96xf32>
    %cst = arith.constant dense<0.000000e+00> : vector<16x96xf32>
    %2 = tpu.matmul %0, %1, %cst {dimension_numbers = #tpu.dot_dimension_numbers<[1], [0], [0], [1], [0, 0, 1, 1], [], []>} : vector<16x96xf32>, vector<96x96xf32>, vector<16x96xf32> -> vector<16x96xf32>
    %3 = vector.extract_strided_slice %2 {offsets = [0, 0], sizes = [16, 8], strides = [1, 1]} : vector<16x96xf32> to vector<16x8xf32>
    %4 = vector.extract_strided_slice %2 {offsets = [0, 8], sizes = [16, 8], strides = [1, 1]} : vector<16x96xf32> to vector<16x8xf32>
    %5 = vector.extract_strided_slice %2 {offsets = [0, 16], sizes = [16, 8], strides = [1, 1]} : vector<16x96xf32> to vector<16x8xf32>
    %6 = vector.extract_strided_slice %2 {offsets = [0, 24], sizes = [16, 8], strides = [1, 1]} : vector<16x96xf32> to vector<16x8xf32>
    %7 = vector.shape_cast %3 : vector<16x8xf32> to vector<1x16x8xf32>
    %8 = vector.shape_cast %4 : vector<16x8xf32> to vector<1x16x8xf32>
    %9 = vector.shape_cast %5 : vector<16x8xf32> to vector<1x16x8xf32>
    %10 = vector.shape_cast %6 : vector<16x8xf32> to vector<1x16x8xf32>
    %11 = tpu.concatenate %7, %8, %9, %10 in 0 : vector<1x16x8xf32>, vector<1x16x8xf32>, vector<1x16x8xf32>, vector<1x16x8xf32> -> vector<4x16x8xf32>
    %12 = vector.extract_strided_slice %2 {offsets = [0, 32], sizes = [16, 8], strides = [1, 1]} : vector<16x96xf32> to vector<16x8xf32>
    %13 = vector.extract_strided_slice %2 {offsets = [0, 40], sizes = [16, 8], strides = [1, 1]} : vector<16x96xf32> to vector<16x8xf32>
    %14 = vector.extract_strided_slice %2 {offsets = [0, 48], sizes = [16, 8], strides = [1, 1]} : vector<16x96xf32> to vector<16x8xf32>
    %15 = vector.extract_strided_slice %2 {offsets = [0, 56], sizes = [16, 8], strides = [1, 1]} : vector<16x96xf32> to vector<16x8xf32>
    %16 = vector.shape_cast %12 : vector<16x8xf32> to vector<1x16x8xf32>
    %17 = vector.shape_cast %13 : vector<16x8xf32> to vector<1x16x8xf32>
    %18 = vector.shape_cast %14 : vector<16x8xf32> to vector<1x16x8xf32>
    %19 = vector.shape_cast %15 : vector<16x8xf32> to vector<1x16x8xf32>
    %20 = tpu.concatenate %16, %17, %18, %19 in 0 : vector<1x16x8xf32>, vector<1x16x8xf32>, vector<1x16x8xf32>, vector<1x16x8xf32> -> vector<4x16x8xf32>
    %21 = vector.extract_strided_slice %2 {offsets = [0, 64], sizes = [16, 8], strides = [1, 1]} : vector<16x96xf32> to vector<16x8xf32>
    %22 = vector.extract_strided_slice %2 {offsets = [0, 72], sizes = [16, 8], strides = [1, 1]} : vector<16x96xf32> to vector<16x8xf32>
    %23 = vector.extract_strided_slice %2 {offsets = [0, 80], sizes = [16, 8], strides = [1, 1]} : vector<16x96xf32> to vector<16x8xf32>
    %24 = vector.extract_strided_slice %2 {offsets = [0, 88], sizes = [16, 8], strides = [1, 1]} : vector<16x96xf32> to vector<16x8xf32>
    %25 = vector.shape_cast %21 : vector<16x8xf32> to vector<1x16x8xf32>
    %26 = vector.shape_cast %22 : vector<16x8xf32> to vector<1x16x8xf32>
    %27 = vector.shape_cast %23 : vector<16x8xf32> to vector<1x16x8xf32>
    %28 = vector.shape_cast %24 : vector<16x8xf32> to vector<1x16x8xf32>
    %29 = tpu.concatenate %25, %26, %27, %28 in 0 : vector<1x16x8xf32>, vector<1x16x8xf32>, vector<1x16x8xf32>, vector<1x16x8xf32> -> vector<4x16x8xf32>
    %cst_3 = arith.constant dense<0.000000e+00> : vector<4x16x16xf32>
    %30 = tpu.matmul %29, %20, %cst_3 {dimension_numbers = #tpu.dot_dimension_numbers<[2], [2], [1], [1], [0, 0, 0, 1, 1, 1], [0], [0]>} : vector<4x16x8xf32>, vector<4x16x8xf32>, vector<4x16x16xf32> -> vector<4x16x16xf32>
    %cst_4 = arith.constant 0.176776692 : f32
    %31 = vector.broadcast %cst_4 : f32 to vector<4x16x16xf32>
    %32 = arith.mulf %30, %31 : vector<4x16x16xf32>
    %c0_5 = arith.constant 0 : index
    %c0_6 = arith.constant 0 : index
    %33 = vector.load %arg1[%c0_5, %c0_6] : memref<16x16xf32, #tpu.memory_space<vmem>>, vector<16x16xf32>
    %34 = vector.shape_cast %33 : vector<16x16xf32> to vector<1x16x16xf32>
    %35 = vector.broadcast %34 : vector<1x16x16xf32> to vector<4x16x16xf32>
    %36 = arith.addf %32, %35 : vector<4x16x16xf32>
    %cst_7 = arith.constant dense<0xFF800000> : vector<4x16xf32>
    %37 = vector.multi_reduction <maximumf>, %36, %cst_7 [2] : vector<4x16x16xf32> to vector<4x16xf32>
    %38 = vector.shape_cast %37 : vector<4x16xf32> to vector<4x16x1xf32>
    %39 = vector.broadcast %38 : vector<4x16x1xf32> to vector<4x16x16xf32>
    %40 = arith.subf %36, %39 : vector<4x16x16xf32>
    %41 = math.exp %40 : vector<4x16x16xf32>
    %cst_8 = arith.constant dense<0.000000e+00> : vector<4x16xf32>
    %42 = vector.multi_reduction <add>, %41, %cst_8 [2] : vector<4x16x16xf32> to vector<4x16xf32>
    %43 = vector.shape_cast %42 : vector<4x16xf32> to vector<4x16x1xf32>
    %44 = tpu.reciprocal %43 : vector<4x16x1xf32> -> vector<4x16x1xf32>
    %45 = vector.broadcast %44 : vector<4x16x1xf32> to vector<4x16x16xf32>
    %46 = arith.mulf %41, %45 : vector<4x16x16xf32>
    %cst_9 = arith.constant dense<0.000000e+00> : vector<4x16x8xf32>
    %47 = tpu.matmul %46, %11, %cst_9 {dimension_numbers = #tpu.dot_dimension_numbers<[2], [1], [1], [2], [0, 0, 0, 1, 1, 2], [0], [0]>} : vector<4x16x16xf32>, vector<4x16x8xf32>, vector<4x16x8xf32> -> vector<4x16x8xf32>
    %c0_10 = arith.constant 0 : index
    %c0_11 = arith.constant 0 : index
    %48 = vector.load %arg3[%c0_10, %c0_11] : memref<32x32xf32, #tpu.memory_space<vmem>>, vector<32x32xf32>
    %c0_12 = arith.constant 0 : index
    %c0_13 = arith.constant 0 : index
    %49 = vector.load %arg4[%c0_12, %c0_13] : memref<1x32xf32, #tpu.memory_space<vmem>>, vector<1x32xf32>
    %50 = vector.extract_strided_slice %47 {offsets = [0, 0, 0], sizes = [1, 16, 8], strides = [1, 1, 1]} : vector<4x16x8xf32> to vector<1x16x8xf32>
    %51 = vector.shape_cast %50 : vector<1x16x8xf32> to vector<16x8xf32>
    %52 = vector.extract_strided_slice %48 {offsets = [0, 0], sizes = [8, 32], strides = [1, 1]} : vector<32x32xf32> to vector<8x32xf32>
    %cst_14 = arith.constant dense<0.000000e+00> : vector<16x32xf32>
    %53 = tpu.matmul %51, %52, %cst_14 {dimension_numbers = #tpu.dot_dimension_numbers<[1], [0], [0], [1], [0, 0, 1, 1], [], []>} : vector<16x8xf32>, vector<8x32xf32>, vector<16x32xf32> -> vector<16x32xf32>
    %54 = vector.broadcast %49 : vector<1x32xf32> to vector<16x32xf32>
    %55 = arith.addf %54, %53 : vector<16x32xf32>
    %56 = vector.extract_strided_slice %47 {offsets = [1, 0, 0], sizes = [1, 16, 8], strides = [1, 1, 1]} : vector<4x16x8xf32> to vector<1x16x8xf32>
    %57 = vector.shape_cast %56 : vector<1x16x8xf32> to vector<16x8xf32>
    %58 = vector.extract_strided_slice %48 {offsets = [8, 0], sizes = [8, 32], strides = [1, 1]} : vector<32x32xf32> to vector<8x32xf32>
    %cst_15 = arith.constant dense<0.000000e+00> : vector<16x32xf32>
    %59 = tpu.matmul %57, %58, %cst_15 {dimension_numbers = #tpu.dot_dimension_numbers<[1], [0], [0], [1], [0, 0, 1, 1], [], []>} : vector<16x8xf32>, vector<8x32xf32>, vector<16x32xf32> -> vector<16x32xf32>
    %60 = arith.addf %55, %59 : vector<16x32xf32>
    %61 = vector.extract_strided_slice %47 {offsets = [2, 0, 0], sizes = [1, 16, 8], strides = [1, 1, 1]} : vector<4x16x8xf32> to vector<1x16x8xf32>
    %62 = vector.shape_cast %61 : vector<1x16x8xf32> to vector<16x8xf32>
    %63 = vector.extract_strided_slice %48 {offsets = [16, 0], sizes = [8, 32], strides = [1, 1]} : vector<32x32xf32> to vector<8x32xf32>
    %cst_16 = arith.constant dense<0.000000e+00> : vector<16x32xf32>
    %64 = tpu.matmul %62, %63, %cst_16 {dimension_numbers = #tpu.dot_dimension_numbers<[1], [0], [0], [1], [0, 0, 1, 1], [], []>} : vector<16x8xf32>, vector<8x32xf32>, vector<16x32xf32> -> vector<16x32xf32>
    %65 = arith.addf %60, %64 : vector<16x32xf32>
    %66 = vector.extract_strided_slice %47 {offsets = [3, 0, 0], sizes = [1, 16, 8], strides = [1, 1, 1]} : vector<4x16x8xf32> to vector<1x16x8xf32>
    %67 = vector.shape_cast %66 : vector<1x16x8xf32> to vector<16x8xf32>
    %68 = vector.extract_strided_slice %48 {offsets = [24, 0], sizes = [8, 32], strides = [1, 1]} : vector<32x32xf32> to vector<8x32xf32>
    %cst_17 = arith.constant dense<0.000000e+00> : vector<16x32xf32>
    %69 = tpu.matmul %67, %68, %cst_17 {dimension_numbers = #tpu.dot_dimension_numbers<[1], [0], [0], [1], [0, 0, 1, 1], [], []>} : vector<16x8xf32>, vector<8x32xf32>, vector<16x32xf32> -> vector<16x32xf32>
    %70 = arith.addf %65, %69 : vector<16x32xf32>
    %71 = vector.extract_strided_slice %0 {offsets = [0, 64], sizes = [16, 32], strides = [1, 1]} : vector<16x96xf32> to vector<16x32xf32>
    %72 = arith.addf %70, %71 : vector<16x32xf32>
    %cst_18 = arith.constant dense<0.000000e+00> : vector<16xf32>
    %73 = vector.multi_reduction <add>, %72, %cst_18 [1] : vector<16x32xf32> to vector<16xf32>
    %74 = vector.shape_cast %73 : vector<16xf32> to vector<16x1xf32>
    %cst_19 = arith.constant 3.200000e+01 : f32
    %75 = vector.broadcast %cst_19 : f32 to vector<16x1xf32>
    %76 = arith.divf %74, %75 : vector<16x1xf32>
    %77 = vector.broadcast %76 : vector<16x1xf32> to vector<16x32xf32>
    %78 = arith.subf %72, %77 : vector<16x32xf32>
    %79 = arith.mulf %78, %78 : vector<16x32xf32>
    %cst_20 = arith.constant dense<0.000000e+00> : vector<16xf32>
    %80 = vector.multi_reduction <add>, %79, %cst_20 [1] : vector<16x32xf32> to vector<16xf32>
    %81 = vector.shape_cast %80 : vector<16xf32> to vector<16x1xf32>
    %cst_21 = arith.constant 3.200000e+01 : f32
    %82 = vector.broadcast %cst_21 : f32 to vector<16x1xf32>
    %83 = arith.divf %81, %82 : vector<16x1xf32>
    %84 = vector.broadcast %76 : vector<16x1xf32> to vector<16x32xf32>
    %85 = arith.subf %72, %84 : vector<16x32xf32>
    %cst_22 = arith.constant 9.99999974E-6 : f32
    %86 = vector.broadcast %cst_22 : f32 to vector<16x1xf32>
    %87 = arith.addf %83, %86 : vector<16x1xf32>
    %88 = math.rsqrt %87 : vector<16x1xf32>
    %89 = vector.broadcast %88 : vector<16x1xf32> to vector<16x32xf32>
    %90 = arith.mulf %85, %89 : vector<16x32xf32>
    %c0_23 = arith.constant 0 : index
    %c0_24 = arith.constant 0 : index
    %91 = vector.load %arg5[%c0_23, %c0_24] : memref<1x32xf32, #tpu.memory_space<vmem>>, vector<1x32xf32>
    %92 = vector.broadcast %91 : vector<1x32xf32> to vector<16x32xf32>
    %93 = arith.mulf %90, %92 : vector<16x32xf32>
    %c0_25 = arith.constant 0 : index
    %c0_26 = arith.constant 0 : index
    %94 = vector.load %arg6[%c0_25, %c0_26] : memref<1x32xf32, #tpu.memory_space<vmem>>, vector<1x32xf32>
    %95 = vector.broadcast %94 : vector<1x32xf32> to vector<16x32xf32>
    %96 = arith.addf %93, %95 : vector<16x32xf32>
    %c0_27 = arith.constant 0 : index
    %c0_28 = arith.constant 0 : index
    %97 = vector.load %arg7[%c0_27, %c0_28] : memref<32x128xf32, #tpu.memory_space<vmem>>, vector<32x128xf32>
    %cst_29 = arith.constant dense<0.000000e+00> : vector<16x128xf32>
    %98 = tpu.matmul %96, %97, %cst_29 {dimension_numbers = #tpu.dot_dimension_numbers<[1], [0], [0], [1], [0, 0, 1, 1], [], []>} : vector<16x32xf32>, vector<32x128xf32>, vector<16x128xf32> -> vector<16x128xf32>
    %c0_30 = arith.constant 0 : index
    %c0_31 = arith.constant 0 : index
    %99 = vector.load %arg8[%c0_30, %c0_31] : memref<1x128xf32, #tpu.memory_space<vmem>>, vector<1x128xf32>
    %100 = vector.broadcast %99 : vector<1x128xf32> to vector<16x128xf32>
    %101 = arith.addf %98, %100 : vector<16x128xf32>
    %cst_32 = arith.constant 0.000000e+00 : f32
    %102 = vector.broadcast %cst_32 : f32 to vector<16x128xf32>
    %103 = arith.maximumf %101, %102 : vector<16x128xf32>
    %c0_33 = arith.constant 0 : index
    %c0_34 = arith.constant 0 : index
    %104 = vector.load %arg9[%c0_33, %c0_34] : memref<128x32xf32, #tpu.memory_space<vmem>>, vector<128x32xf32>
    %cst_35 = arith.constant dense<0.000000e+00> : vector<16x32xf32>
    %105 = tpu.matmul %103, %104, %cst_35 {dimension_numbers = #tpu.dot_dimension_numbers<[1], [0], [0], [1], [0, 0, 1, 1], [], []>} : vector<16x128xf32>, vector<128x32xf32>, vector<16x32xf32> -> vector<16x32xf32>
    %c0_36 = arith.constant 0 : index
    %c0_37 = arith.constant 0 : index
    %106 = vector.load %arg10[%c0_36, %c0_37] : memref<1x32xf32, #tpu.memory_space<vmem>>, vector<1x32xf32>
    %107 = vector.broadcast %106 : vector<1x32xf32> to vector<16x32xf32>
    %108 = arith.addf %105, %107 : vector<16x32xf32>
    %109 = arith.addf %108, %96 : vector<16x32xf32>
    %cst_38 = arith.constant dense<0.000000e+00> : vector<16xf32>
    %110 = vector.multi_reduction <add>, %109, %cst_38 [1] : vector<16x32xf32> to vector<16xf32>
    %111 = vector.shape_cast %110 : vector<16xf32> to vector<16x1xf32>
    %cst_39 = arith.constant 3.200000e+01 : f32
    %112 = vector.broadcast %cst_39 : f32 to vector<16x1xf32>
    %113 = arith.divf %111, %112 : vector<16x1xf32>
    %114 = vector.broadcast %113 : vector<16x1xf32> to vector<16x32xf32>
    %115 = arith.subf %109, %114 : vector<16x32xf32>
    %116 = arith.mulf %115, %115 : vector<16x32xf32>
    %cst_40 = arith.constant dense<0.000000e+00> : vector<16xf32>
    %117 = vector.multi_reduction <add>, %116, %cst_40 [1] : vector<16x32xf32> to vector<16xf32>
    %118 = vector.shape_cast %117 : vector<16xf32> to vector<16x1xf32>
    %cst_41 = arith.constant 3.200000e+01 : f32
    %119 = vector.broadcast %cst_41 : f32 to vector<16x1xf32>
    %120 = arith.divf %118, %119 : vector<16x1xf32>
    %121 = vector.broadcast %113 : vector<16x1xf32> to vector<16x32xf32>
    %122 = arith.subf %109, %121 : vector<16x32xf32>
    %cst_42 = arith.constant 9.99999974E-6 : f32
    %123 = vector.broadcast %cst_42 : f32 to vector<16x1xf32>
    %124 = arith.addf %120, %123 : vector<16x1xf32>
    %125 = math.rsqrt %124 : vector<16x1xf32>
    %126 = vector.broadcast %125 : vector<16x1xf32> to vector<16x32xf32>
    %127 = arith.mulf %122, %126 : vector<16x32xf32>
    %c0_43 = arith.constant 0 : index
    %c0_44 = arith.constant 0 : index
    %128 = vector.load %arg11[%c0_43, %c0_44] : memref<1x32xf32, #tpu.memory_space<vmem>>, vector<1x32xf32>
    %129 = vector.broadcast %128 : vector<1x32xf32> to vector<16x32xf32>
    %130 = arith.mulf %127, %129 : vector<16x32xf32>
    %c0_45 = arith.constant 0 : index
    %c0_46 = arith.constant 0 : index
    %131 = vector.load %arg12[%c0_45, %c0_46] : memref<1x32xf32, #tpu.memory_space<vmem>>, vector<1x32xf32>
    %132 = vector.broadcast %131 : vector<1x32xf32> to vector<16x32xf32>
    %133 = arith.addf %130, %132 : vector<16x32xf32>
    %c0_47 = arith.constant 0 : index
    %c0_48 = arith.constant 0 : index
    %134 = vector.load %arg13[%c0_47, %c0_48] : memref<16x32xf32, #tpu.memory_space<vmem>>, vector<16x32xf32>
    tpu.vector_store %arg13[%c0_47, %c0_48], %133 {strides = array<i32>} : memref<16x32xf32, #tpu.memory_space<vmem>>, vector<16x32xf32>,
    return
  }
}

</mosaic_0001>

<llo_original>
// kernel: transformer_block.1
$region0: #{transformer_block.1}
  #allocation0 [shape = 'u32[]', space=smem, size = 0x4, offset = 0x4, fixed_abs, tag = 'smem constant byte address 0x4 - core index']
  #allocation1 [shape = 'u32[144,128]{1,0:T(1,128)}', space=vmem, size = 0x12000, scoped, tag = 'internal scratch']
  %s0 = inlined_call_operand.vmem [shape: f32[16,96], index: 0, kind: input, shape index: {}]
  %s1 = inlined_call_operand.vmem [shape: f32[16,16], index: 1, kind: input, shape index: {}]
  %s2 = inlined_call_operand.vmem [shape: f32[96,96], index: 2, kind: input, shape index: {}]
  %s3 = inlined_call_operand.vmem [shape: f32[32,32], index: 3, kind: input, shape index: {}]
  %s4 = inlined_call_operand.vmem [shape: f32[1,32], index: 4, kind: input, shape index: {}]
  %s5 = inlined_call_operand.vmem [shape: f32[1,32], index: 5, kind: input, shape index: {}]
  %s6 = inlined_call_operand.vmem [shape: f32[1,32], index: 6, kind: input, shape index: {}]
  %s7 = inlined_call_operand.vmem [shape: f32[32,128], index: 7, kind: input, shape index: {}]
  %s8 = inlined_call_operand.vmem [shape: f32[1,128], index: 8, kind: input, shape index: {}]
  %s9 = inlined_call_operand.vmem [shape: f32[128,32], index: 9, kind: input, shape index: {}]
  %s10 = inlined_call_operand.vmem [shape: f32[1,32], index: 10, kind: input, shape index: {}]
  %s11 = inlined_call_operand.vmem [shape: f32[1,32], index: 11, kind: input, shape index: {}]
  %s12 = inlined_call_operand.vmem [shape: f32[1,32], index: 12, kind: input, shape index: {}]
  %s13 = inlined_call_operand.hbm [shape: f32[16,32], index: 13, kind: output, shape index: {}]
  %s14 = sld [smem:[#allocation0]]
  $region62: #{transformer_block.1} parent=0
    _
  %s16 = ssub.s32 1, %s14
  %s17 = scalar_select 0, %s16, %s14
  $region1: #{transformer_block.1} parent=0
    #allocation2 [shape = 'u8[8192]{0}', space=vmem, size = 0x2000, scoped, tag = 'output window, operand 0, single buffered']
    #allocation3 [shape = 's32[1]{0}', space=sflag, size = 0x4, scoped, tag = 'scoped memory for transformer_block.1']
    %18 = vsyncpa [#allocation3], 0
    // Predicated region
    $region2: #{transformer_block.1} parent=1 // pred_check
      _
    $region3: #{transformer_block.1} parent=1 // pred_check_branch
      %20 = sbr.rel (0) target = $region5
    $region4: #{transformer_block.1} parent=1 // pred_region
      _
    $region5: #{transformer_block.1} parent=1 // pred_fallthru
      _
    // Predicated region
    $region6: #{transformer_block.1} parent=1 // pred_check
      _
    $region7: #{transformer_block.1} parent=1 // pred_check_branch
      %22 = sbr.rel (0) target = $region9
    $region8: #{transformer_block.1} parent=1 // pred_region
      _
    $region9: #{transformer_block.1} parent=1 // pred_fallthru
      _
    // Predicated region
    $region10: #{transformer_block.1} parent=1 // pred_check
      _
    $region11: #{transformer_block.1} parent=1 // pred_check_branch
      %24 = sbr.rel (0) target = $region13
    $region12: #{transformer_block.1} parent=1 // pred_region
      _
    $region13: #{transformer_block.1} parent=1 // pred_fallthru
      _
    // Predicated region
    $region14: #{transformer_block.1} parent=1 // pred_check
      _
    $region15: #{transformer_block.1} parent=1 // pred_check_branch
      %26 = sbr.rel (0) target = $region17
    $region16: #{transformer_block.1} parent=1 // pred_region
      _
    $region17: #{transformer_block.1} parent=1 // pred_fallthru
      _
    // Predicated region
    $region18: #{transformer_block.1} parent=1 // pred_check
      _
    $region19: #{transformer_block.1} parent=1 // pred_check_branch
      %28 = sbr.rel (0) target = $region21
    $region20: #{transformer_block.1} parent=1 // pred_region
      _
    $region21: #{transformer_block.1} parent=1 // pred_fallthru
      _
    // Predicated region
    $region22: #{transformer_block.1} parent=1 // pred_check
      _
    $region23: #{transformer_block.1} parent=1 // pred_check_branch
      %30 = sbr.rel (0) target = $region25
    $region24: #{transformer_block.1} parent=1 // pred_region
      _
    $region25: #{transformer_block.1} parent=1 // pred_fallthru
      _
    // Predicated region
    $region26: #{transformer_block.1} parent=1 // pred_check
      _
    $region27: #{transformer_block.1} parent=1 // pred_check_branch
      %32 = sbr.rel (0) target = $region29
    $region28: #{transformer_block.1} parent=1 // pred_region
      _
    $region29: #{transformer_block.1} parent=1 // pred_fallthru
      _
    // Predicated region
    $region30: #{transformer_block.1} parent=1 // pred_check
      _
    $region31: #{transformer_block.1} parent=1 // pred_check_branch
      %34 = sbr.rel (0) target = $region33
    $region32: #{transformer_block.1} parent=1 // pred_region
      _
    $region33: #{transformer_block.1} parent=1 // pred_fallthru
      _
    // Predicated region
    $region34: #{transformer_block.1} parent=1 // pred_check
      _
    $region35: #{transformer_block.1} parent=1 // pred_check_branch
      %36 = sbr.rel (0) target = $region37
    $region36: #{transformer_block.1} parent=1 // pred_region
      _
    $region37: #{transformer_block.1} parent=1 // pred_fallthru
      _
    // Predicated region
    $region38: #{transformer_block.1} parent=1 // pred_check
      _
    $region39: #{transformer_block.1} parent=1 // pred_check_branch
      %38 = sbr.rel (0) target = $region41
    $region40: #{transformer_block.1} parent=1 // pred_region
      _
    $region41: #{transformer_block.1} parent=1 // pred_fallthru
      _
    // Predicated region
    $region42: #{transformer_block.1} parent=1 // pred_check
      _
    $region43: #{transformer_block.1} parent=1 // pred_check_branch
      %40 = sbr.rel (0) target = $region45
    $region44: #{transformer_block.1} parent=1 // pred_region
      _
    $region45: #{transformer_block.1} parent=1 // pred_fallthru
      _
    // Predicated region
    $region46: #{transformer_block.1} parent=1 // pred_check
      _
    $region47: #{transformer_block.1} parent=1 // pred_check_branch
      %42 = sbr.rel (0) target = $region49
    $region48: #{transformer_block.1} parent=1 // pred_region
      _
    $region49: #{transformer_block.1} parent=1 // pred_fallthru
      _
    // Predicated region
    $region50: #{transformer_block.1} parent=1 // pred_check
      _
    $region51: #{transformer_block.1} parent=1 // pred_check_branch
      %44 = sbr.rel (0) target = $region53
    $region52: #{transformer_block.1} parent=1 // pred_region
      _
    $region53: #{transformer_block.1} parent=1 // pred_fallthru
      _
    %v45 = vld [vmem:[%s0] sm:$0xff]
    %v46 = vld [vmem:[%s0 + $0x8] sm:$0xff]
    %v47 = vld [vmem:[%s2] sm:$0xff]
    %v48 = vld [vmem:[%s2 + $0x8] sm:$0xff]
    %v49 = vld [vmem:[%s2 + $0x10] sm:$0xff]
    %v50 = vld [vmem:[%s2 + $0x18] sm:$0xff]
    %v51 = vld [vmem:[%s2 + $0x20] sm:$0xff]
    %v52 = vld [vmem:[%s2 + $0x28] sm:$0xff]
    %v53 = vld [vmem:[%s2 + $0x30] sm:$0xff]
    %v54 = vld [vmem:[%s2 + $0x38] sm:$0xff]
    %v55 = vld [vmem:[%s2 + $0x40] sm:$0xff]
    %v56 = vld [vmem:[%s2 + $0x48] sm:$0xff]
    %v57 = vld [vmem:[%s2 + $0x50] sm:$0xff]
    %v58 = vld [vmem:[%s2 + $0x58] sm:$0xff]
    %vm59 = vcmask 785408
    %v61 = vsel %vm59, %v45, 0
    %v64 = vsel %vm59, %v46, 0
    %66 = vmatprep.subr.mxu0 0.0
    %67 = vmatpush1.msra.mxu0 %v47
    %68 = vmatprep.subr.mxu0 0.0
    %69 = vmatpush1.msra.mxu0 %v48
    %70 = vmatprep.subr.mxu0 0.0
    %71 = vmatpush1.msra.mxu0 %v49
    %72 = vmatprep.subr.mxu0 0.0
    %73 = vmatpush1.msra.mxu0 %v50
    %74 = vmatprep.subr.mxu0 0.0
    %75 = vmatpush1.msra.mxu0 %v51
    %76 = vmatprep.subr.mxu0 0.0
    %77 = vmatpush1.msra.mxu0 %v52
    %78 = vmatprep.subr.mxu0 0.0
    %79 = vmatpush1.msra.mxu0 %v53
    %80 = vmatprep.subr.mxu0 0.0
    %81 = vmatpush1.msra.mxu0 %v54
    %82 = vmatprep.subr.mxu0 0.0
    %83 = vmatpush1.msra.mxu0 %v55
    %84 = vmatprep.subr.mxu0 0.0
    %85 = vmatpush1.msra.mxu0 %v56
    %86 = vmatprep.subr.mxu0 0.0
    %87 = vmatpush1.msra.mxu0 %v57
    %88 = vmatprep.subr.mxu0 0.0
    %89 = vmatpush1.msra.mxu0 %v58
    %90 = vmatprep.subr.mxu0 0.0
    %91 = vmatpush1.msra.mxu0 0.0
    %92 = vmatprep.subr.mxu0 0.0
    %93 = vmatpush1.msra.mxu0 0.0
    %94 = vmatprep.subr.mxu0 0.0
    %95 = vmatpush1.msra.mxu0 0.0
    %96 = vmatprep.subr.mxu0 0.0
    %97 = vmatpush1.msra.mxu0 0.0
    %98 = vmatprep.subr.mxu0 0.0
    %99 = vmatpush1.msra.mxu0 0.0
    %100 = vmatprep.subr.mxu0 0.0
    %101 = vmatpush1.msra.mxu0 0.0
    %102 = vmatprep.subr.mxu0 0.0
    %103 = vmatpush1.msra.mxu0 0.0
    %104 = vmatprep.subr.mxu0 0.0
    %105 = vmatpush1.msra.mxu0 0.0
    %106 = vmatprep.subr.mxu0 0.0
    %107 = vmatpush1.msra.mxu0 0.0
    %108 = vmatprep.subr.mxu0 0.0
    %109 = vmatpush1.msra.mxu0 0.0
    %110 = vmatprep.subr.mxu0 0.0
    %111 = vmatpush1.msra.mxu0 0.0
    %112 = vmatprep.subr.mxu0 0.0
    %113 = vmatpush1.msra.mxu0 0.0
    %114 = vmatprep.subr.mxu0 0.0
    %115 = vmatpush1.msra.mxu0 0.0
    %116 = vmatprep.subr.mxu0 0.0
    %117 = vmatpush1.msra.mxu0 0.0
    %118 = vmatprep.subr.mxu0 0.0
    %119 = vmatpush1.msra.mxu0 0.0
    %120 = vmatprep.subr.mxu0 0.0
    %121 = vmatpush1.msra.mxu0 0.0
    %122 = vmatprep.subr.mxu0 0.0
    %123 = vmatpush1.msra.mxu0 0.0
    %124 = vmatprep.subr.mxu0 0.0
    %125 = vmatpush1.msra.mxu0 0.0
    %126 = vmatprep.subr.mxu0 0.0
    %127 = vmatpush1.msra.mxu0 0.0
    %128 = vmatprep.subr.mxu0 0.0
    %129 = vmatpush1.msra.mxu0 0.0
    %130 = vmatprep.mubr.f32.mxu0 0.0
    %131 = vmatmul.mubr.f32.gmra.mrb[0].mxu0 %v61
    %v132 = vpop.f32.mrb[0].mxu0
    %v133 = vadd.f32 0.0, %v132
    %v134 = vpop.f32.mrb[0].mxu0
    %135 = vmatprep.mubr.f32.mxu0 0.0
    %136 = vmatmul.mubr.f32.gmra.mrb[0].mxu0 %v64
    %v137 = vpop.f32.mrb[0].mxu0
    %v138 = vadd.f32 0.0, %v137
    %v139 = vpop.f32.mrb[0].mxu0
    %140 = vdwg.mxu0
    %143 = vrot.lane.b32.xlu0 %v133, 120
    %v144 = vpop.permute.xlu0 %143
    %145 = vrot.lane.b32.xlu0 %v138, 120
    %v146 = vpop.permute.xlu0 %145
    %149 = vrot.lane.b32.xlu0 %v133, 112
    %v150 = vpop.permute.xlu0 %149
    %151 = vrot.lane.b32.xlu0 %v138, 112
    %v152 = vpop.permute.xlu0 %151
    %155 = vrot.lane.b32.xlu0 %v133, 104
    %v156 = vpop.permute.xlu0 %155
    %157 = vrot.lane.b32.xlu0 %v138, 104
    %v158 = vpop.permute.xlu0 %157
    %161 = vrot.lane.b32.xlu0 %v133, 64
    %v162 = vpop.permute.xlu0 %161
    %163 = vrot.lane.b32.xlu0 %v138, 64
    %v164 = vpop.permute.xlu0 %163
    %165 = vrot.lane.b32.xlu0 %v133, 96
    %v166 = vpop.permute.xlu0 %165
    %167 = vrot.lane.b32.xlu0 %v138, 96
    %v168 = vpop.permute.xlu0 %167
    %vm169 = vcmask 64512
    %v170 = vsel %vm169, %v162, 0
    %v172 = vsel %vm169, %v164, 0
    %v174 = vsel %vm169, %v166, 0
    %v176 = vsel %vm169, %v168, 0
    %178 = vmatprep.subr.mxu0 0.0
    %179 = vmatpush1.xpose.msra.mxu0 %v174
    %180 = vmatprep.subr.mxu0 0.0
    %181 = vmatpush1.xpose.msra.mxu0 %v176
    %182 = vmatprep.subr.mxu0 0.0
    %183 = vmatpush1.xpose.msra.mxu0 0.0
    %184 = vmatprep.subr.mxu0 0.0
    %185 = vmatpush1.xpose.msra.mxu0 0.0
    %186 = vmatprep.subr.mxu0 0.0
    %187 = vmatpush1.xpose.msra.mxu0 0.0
    %188 = vmatprep.subr.mxu0 0.0
    %189 = vmatpush1.xpose.msra.mxu0 0.0
    %190 = vmatprep.subr.mxu0 0.0
    %191 = vmatpush1.xpose.msra.mxu0 0.0
    %192 = vmatprep.subr.mxu0 0.0
    %193 = vmatpush1.xpose.msra.mxu0 0.0
    %194 = vmatprep.subr.mxu0 0.0
    %195 = vmatpush1.xpose.msra.mxu0 0.0
    %196 = vmatprep.subr.mxu0 0.0
    %197 = vmatpush1.xpose.msra.mxu0 0.0
    %198 = vmatprep.subr.mxu0 0.0
    %199 = vmatpush1.xpose.msra.mxu0 0.0
    %200 = vmatprep.subr.mxu0 0.0
    %201 = vmatpush1.xpose.msra.mxu0 0.0
    %202 = vmatprep.subr.mxu0 0.0
    %203 = vmatpush1.xpose.msra.mxu0 0.0
    %204 = vmatprep.subr.mxu0 0.0
    %205 = vmatpush1.xpose.msra.mxu0 0.0
    %206 = vmatprep.subr.mxu0 0.0
    %207 = vmatpush1.xpose.msra.mxu0 0.0
    %208 = vmatprep.subr.mxu0 0.0
    %209 = vmatpush1.xpose.msra.mxu0 0.0
    %210 = vmatprep.subr.mxu0 0.0
    %211 = vmatpush1.xpose.msra.mxu0 0.0
    %212 = vmatprep.subr.mxu0 0.0
    %213 = vmatpush1.xpose.msra.mxu0 0.0
    %214 = vmatprep.subr.mxu0 0.0
    %215 = vmatpush1.xpose.msra.mxu0 0.0
    %216 = vmatprep.subr.mxu0 0.0
    %217 = vmatpush1.xpose.msra.mxu0 0.0
    %218 = vmatprep.subr.mxu0 0.0
    %219 = vmatpush1.xpose.msra.mxu0 0.0
    %220 = vmatprep.subr.mxu0 0.0
    %221 = vmatpush1.xpose.msra.mxu0 0.0
    %222 = vmatprep.subr.mxu0 0.0
    %223 = vmatpush1.xpose.msra.mxu0 0.0
    %224 = vmatprep.subr.mxu0 0.0
    %225 = vmatpush1.xpose.msra.mxu0 0.0
    %226 = vmatprep.subr.mxu0 0.0
    %227 = vmatpush1.xpose.msra.mxu0 0.0
    %228 = vmatprep.subr.mxu0 0.0
    %229 = vmatpush1.xpose.msra.mxu0 0.0
    %230 = vmatprep.subr.mxu0 0.0
    %231 = vmatpush1.xpose.msra.mxu0 0.0
    %232 = vmatprep.subr.mxu0 0.0
    %233 = vmatpush1.xpose.msra.mxu0 0.0
    %234 = vmatprep.subr.mxu0 0.0
    %235 = vmatpush1.xpose.msra.mxu0 0.0
    %236 = vmatprep.subr.mxu0 0.0
    %237 = vmatpush1.xpose.msra.mxu0 0.0
    %238 = vmatprep.subr.mxu0 0.0
    %239 = vmatpush1.xpose.msra.mxu0 0.0
    %240 = vmatprep.subr.mxu0 0.0
    %241 = vmatpush1.xpose.msra.mxu0 0.0
    %242 = vmatprep.mubr.f32.mxu0 0.0
    %243 = vmatmul.mubr.f32.gmra.mrb[0].mxu0 %v170
    %v244 = vpop.f32.mrb[0].mxu0
    %v245 = vadd.f32 0.0, %v244
    %v246 = vpop.f32.mrb[0].mxu0
    %247 = vmatprep.mubr.f32.mxu0 0.0
    %248 = vmatmul.mubr.f32.gmra.mrb[0].mxu0 %v172
    %v249 = vpop.f32.mrb[0].mxu0
    %v250 = vadd.f32 0.0, %v249
    %v251 = vpop.f32.mrb[0].mxu0
    %252 = vdwg.mxu0
    %253 = vrot.lane.b32.xlu0 %v144, 64
    %v254 = vpop.permute.xlu0 %253
    %255 = vrot.lane.b32.xlu0 %v146, 64
    %v256 = vpop.permute.xlu0 %255
    %257 = vrot.lane.b32.xlu0 %v144, 96
    %v258 = vpop.permute.xlu0 %257
    %259 = vrot.lane.b32.xlu0 %v146, 96
    %v260 = vpop.permute.xlu0 %259
    %v261 = vsel %vm169, %v254, 0
    %v263 = vsel %vm169, %v256, 0
    %v265 = vsel %vm169, %v258, 0
    %v267 = vsel %vm169, %v260, 0
    %269 = vmatprep.subr.mxu0 0.0
    %270 = vmatpush1.xpose.msra.mxu0 %v265
    %271 = vmatprep.subr.mxu0 0.0
    %272 = vmatpush1.xpose.msra.mxu0 %v267
    %273 = vmatprep.subr.mxu0 0.0
    %274 = vmatpush1.xpose.msra.mxu0 0.0
    %275 = vmatprep.subr.mxu0 0.0
    %276 = vmatpush1.xpose.msra.mxu0 0.0
    %277 = vmatprep.subr.mxu0 0.0
    %278 = vmatpush1.xpose.msra.mxu0 0.0
    %279 = vmatprep.subr.mxu0 0.0
    %280 = vmatpush1.xpose.msra.mxu0 0.0
    %281 = vmatprep.subr.mxu0 0.0
    %282 = vmatpush1.xpose.msra.mxu0 0.0
    %283 = vmatprep.subr.mxu0 0.0
    %284 = vmatpush1.xpose.msra.mxu0 0.0
    %285 = vmatprep.subr.mxu0 0.0
    %286 = vmatpush1.xpose.msra.mxu0 0.0
    %287 = vmatprep.subr.mxu0 0.0
    %288 = vmatpush1.xpose.msra.mxu0 0.0
    %289 = vmatprep.subr.mxu0 0.0
    %290 = vmatpush1.xpose.msra.mxu0 0.0
    %291 = vmatprep.subr.mxu0 0.0
    %292 = vmatpush1.xpose.msra.mxu0 0.0
    %293 = vmatprep.subr.mxu0 0.0
    %294 = vmatpush1.xpose.msra.mxu0 0.0
    %295 = vmatprep.subr.mxu0 0.0
    %296 = vmatpush1.xpose.msra.mxu0 0.0
    %297 = vmatprep.subr.mxu0 0.0
    %298 = vmatpush1.xpose.msra.mxu0 0.0
    %299 = vmatprep.subr.mxu0 0.0
    %300 = vmatpush1.xpose.msra.mxu0 0.0
    %301 = vmatprep.subr.mxu0 0.0
    %302 = vmatpush1.xpose.msra.mxu0 0.0
    %303 = vmatprep.subr.mxu0 0.0
    %304 = vmatpush1.xpose.msra.mxu0 0.0
    %305 = vmatprep.subr.mxu0 0.0
    %306 = vmatpush1.xpose.msra.mxu0 0.0
    %307 = vmatprep.subr.mxu0 0.0
    %308 = vmatpush1.xpose.msra.mxu0 0.0
    %309 = vmatprep.subr.mxu0 0.0
    %310 = vmatpush1.xpose.msra.mxu0 0.0
    %311 = vmatprep.subr.mxu0 0.0
    %312 = vmatpush1.xpose.msra.mxu0 0.0
    %313 = vmatprep.subr.mxu0 0.0
    %314 = vmatpush1.xpose.msra.mxu0 0.0
    %315 = vmatprep.subr.mxu0 0.0
    %316 = vmatpush1.xpose.msra.mxu0 0.0
    %317 = vmatprep.subr.mxu0 0.0
    %318 = vmatpush1.xpose.msra.mxu0 0.0
    %319 = vmatprep.subr.mxu0 0.0
    %320 = vmatpush1.xpose.msra.mxu0 0.0
    %321 = vmatprep.subr.mxu0 0.0
    %322 = vmatpush1.xpose.msra.mxu0 0.0
    %323 = vmatprep.subr.mxu0 0.0
    %324 = vmatpush1.xpose.msra.mxu0 0.0
    %325 = vmatprep.subr.mxu0 0.0
    %326 = vmatpush1.xpose.msra.mxu0 0.0
    %327 = vmatprep.subr.mxu0 0.0
    %328 = vmatpush1.xpose.msra.mxu0 0.0
    %329 = vmatprep.subr.mxu0 0.0
    %330 = vmatpush1.xpose.msra.mxu0 0.0
    %331 = vmatprep.subr.mxu0 0.0
    %332 = vmatpush1.xpose.msra.mxu0 0.0
    %333 = vmatprep.mubr.f32.mxu0 0.0
    %334 = vmatmul.mubr.f32.gmra.mrb[0].mxu0 %v261
    %v335 = vpop.f32.mrb[0].mxu0
    %v336 = vadd.f32 0.0, %v335
    %v337 = vpop.f32.mrb[0].mxu0
    %338 = vmatprep.mubr.f32.mxu0 0.0
    %339 = vmatmul.mubr.f32.gmra.mrb[0].mxu0 %v263
    %v340 = vpop.f32.mrb[0].mxu0
    %v341 = vadd.f32 0.0, %v340
    %v342 = vpop.f32.mrb[0].mxu0
    %343 = vdwg.mxu0
    %344 = vrot.lane.b32.xlu0 %v150, 64
    %v345 = vpop.permute.xlu0 %344
    %346 = vrot.lane.b32.xlu0 %v152, 64
    %v347 = vpop.permute.xlu0 %346
    %348 = vrot.lane.b32.xlu0 %v150, 96
    %v349 = vpop.permute.xlu0 %348
    %350 = vrot.lane.b32.xlu0 %v152, 96
    %v351 = vpop.permute.xlu0 %350
    %v352 = vsel %vm169, %v345, 0
    %v354 = vsel %vm169, %v347, 0
    %v356 = vsel %vm169, %v349, 0
    %v358 = vsel %vm169, %v351, 0
    %360 = vmatprep.subr.mxu0 0.0
    %361 = vmatpush1.xpose.msra.mxu0 %v356
    %362 = vmatprep.subr.mxu0 0.0
    %363 = vmatpush1.xpose.msra.mxu0 %v358
    %364 = vmatprep.subr.mxu0 0.0
    %365 = vmatpush1.xpose.msra.mxu0 0.0
    %366 = vmatprep.subr.mxu0 0.0
    %367 = vmatpush1.xpose.msra.mxu0 0.0
    %368 = vmatprep.subr.mxu0 0.0
    %369 = vmatpush1.xpose.msra.mxu0 0.0
    %370 = vmatprep.subr.mxu0 0.0
    %371 = vmatpush1.xpose.msra.mxu0 0.0
    %372 = vmatprep.subr.mxu0 0.0
    %373 = vmatpush1.xpose.msra.mxu0 0.0
    %374 = vmatprep.subr.mxu0 0.0
    %375 = vmatpush1.xpose.msra.mxu0 0.0
    %376 = vmatprep.subr.mxu0 0.0
    %377 = vmatpush1.xpose.msra.mxu0 0.0
    %378 = vmatprep.subr.mxu0 0.0
    %379 = vmatpush1.xpose.msra.mxu0 0.0
    %380 = vmatprep.subr.mxu0 0.0
    %381 = vmatpush1.xpose.msra.mxu0 0.0
    %382 = vmatprep.subr.mxu0 0.0
    %383 = vmatpush1.xpose.msra.mxu0 0.0
    %384 = vmatprep.subr.mxu0 0.0
    %385 = vmatpush1.xpose.msra.mxu0 0.0
    %386 = vmatprep.subr.mxu0 0.0
    %387 = vmatpush1.xpose.msra.mxu0 0.0
    %388 = vmatprep.subr.mxu0 0.0
    %389 = vmatpush1.xpose.msra.mxu0 0.0
    %390 = vmatprep.subr.mxu0 0.0
    %391 = vmatpush1.xpose.msra.mxu0 0.0
    %392 = vmatprep.subr.mxu0 0.0
    %393 = vmatpush1.xpose.msra.mxu0 0.0
    %394 = vmatprep.subr.mxu0 0.0
    %395 = vmatpush1.xpose.msra.mxu0 0.0
    %396 = vmatprep.subr.mxu0 0.0
    %397 = vmatpush1.xpose.msra.mxu0 0.0
    %398 = vmatprep.subr.mxu0 0.0
    %399 = vmatpush1.xpose.msra.mxu0 0.0
    %400 = vmatprep.subr.mxu0 0.0
    %401 = vmatpush1.xpose.msra.mxu0 0.0
    %402 = vmatprep.subr.mxu0 0.0
    %403 = vmatpush1.xpose.msra.mxu0 0.0
    %404 = vmatprep.subr.mxu0 0.0
    %405 = vmatpush1.xpose.msra.mxu0 0.0
    %406 = vmatprep.subr.mxu0 0.0
    %407 = vmatpush1.xpose.msra.mxu0 0.0
    %408 = vmatprep.subr.mxu0 0.0
    %409 = vmatpush1.xpose.msra.mxu0 0.0
    %410 = vmatprep.subr.mxu0 0.0
    %411 = vmatpush1.xpose.msra.mxu0 0.0
    %412 = vmatprep.subr.mxu0 0.0
    %413 = vmatpush1.xpose.msra.mxu0 0.0
    %414 = vmatprep.subr.mxu0 0.0
    %415 = vmatpush1.xpose.msra.mxu0 0.0
    %416 = vmatprep.subr.mxu0 0.0
    %417 = vmatpush1.xpose.msra.mxu0 0.0
    %418 = vmatprep.subr.mxu0 0.0
    %419 = vmatpush1.xpose.msra.mxu0 0.0
    %420 = vmatprep.subr.mxu0 0.0
    %421 = vmatpush1.xpose.msra.mxu0 0.0
    %422 = vmatprep.subr.mxu0 0.0
    %423 = vmatpush1.xpose.msra.mxu0 0.0
    %424 = vmatprep.mubr.f32.mxu0 0.0
    %425 = vmatmul.mubr.f32.gmra.mrb[0].mxu0 %v352
    %v426 = vpop.f32.mrb[0].mxu0
    %v427 = vadd.f32 0.0, %v426
    %v428 = vpop.f32.mrb[0].mxu0
    %429 = vmatprep.mubr.f32.mxu0 0.0
    %430 = vmatmul.mubr.f32.gmra.mrb[0].mxu0 %v354
    %v431 = vpop.f32.mrb[0].mxu0
    %v432 = vadd.f32 0.0, %v431
    %v433 = vpop.f32.mrb[0].mxu0
    %434 = vdwg.mxu0
    %435 = vrot.lane.b32.xlu0 %v156, 64
    %v436 = vpop.permute.xlu0 %435
    %437 = vrot.lane.b32.xlu0 %v158, 64
    %v438 = vpop.permute.xlu0 %437
    %439 = vrot.lane.b32.xlu0 %v156, 96
    %v440 = vpop.permute.xlu0 %439
    %441 = vrot.lane.b32.xlu0 %v158, 96
    %v442 = vpop.permute.xlu0 %441
    %v443 = vsel %vm169, %v436, 0
    %v445 = vsel %vm169, %v438, 0
    %v447 = vsel %vm169, %v440, 0
    %v449 = vsel %vm169, %v442, 0
    %451 = vmatprep.subr.mxu0 0.0
    %452 = vmatpush1.xpose.msra.mxu0 %v447
    %453 = vmatprep.subr.mxu0 0.0
    %454 = vmatpush1.xpose.msra.mxu0 %v449
    %455 = vmatprep.subr.mxu0 0.0
    %456 = vmatpush1.xpose.msra.mxu0 0.0
    %457 = vmatprep.subr.mxu0 0.0
    %458 = vmatpush1.xpose.msra.mxu0 0.0
    %459 = vmatprep.subr.mxu0 0.0
    %460 = vmatpush1.xpose.msra.mxu0 0.0
    %461 = vmatprep.subr.mxu0 0.0
    %462 = vmatpush1.xpose.msra.mxu0 0.0
    %463 = vmatprep.subr.mxu0 0.0
    %464 = vmatpush1.xpose.msra.mxu0 0.0
    %465 = vmatprep.subr.mxu0 0.0
    %466 = vmatpush1.xpose.msra.mxu0 0.0
    %467 = vmatprep.subr.mxu0 0.0
    %468 = vmatpush1.xpose.msra.mxu0 0.0
    %469 = vmatprep.subr.mxu0 0.0
    %470 = vmatpush1.xpose.msra.mxu0 0.0
    %471 = vmatprep.subr.mxu0 0.0
    %472 = vmatpush1.xpose.msra.mxu0 0.0
    %473 = vmatprep.subr.mxu0 0.0
    %474 = vmatpush1.xpose.msra.mxu0 0.0
    %475 = vmatprep.subr.mxu0 0.0
    %476 = vmatpush1.xpose.msra.mxu0 0.0
    %477 = vmatprep.subr.mxu0 0.0
    %478 = vmatpush1.xpose.msra.mxu0 0.0
    %479 = vmatprep.subr.mxu0 0.0
    %480 = vmatpush1.xpose.msra.mxu0 0.0
    %481 = vmatprep.subr.mxu0 0.0
    %482 = vmatpush1.xpose.msra.mxu0 0.0
    %483 = vmatprep.subr.mxu0 0.0
    %484 = vmatpush1.xpose.msra.mxu0 0.0
    %485 = vmatprep.subr.mxu0 0.0
    %486 = vmatpush1.xpose.msra.mxu0 0.0
    %487 = vmatprep.subr.mxu0 0.0
    %488 = vmatpush1.xpose.msra.mxu0 0.0
    %489 = vmatprep.subr.mxu0 0.0
    %490 = vmatpush1.xpose.msra.mxu0 0.0
    %491 = vmatprep.subr.mxu0 0.0
    %492 = vmatpush1.xpose.msra.mxu0 0.0
    %493 = vmatprep.subr.mxu0 0.0
    %494 = vmatpush1.xpose.msra.mxu0 0.0
    %495 = vmatprep.subr.mxu0 0.0
    %496 = vmatpush1.xpose.msra.mxu0 0.0
    %497 = vmatprep.subr.mxu0 0.0
    %498 = vmatpush1.xpose.msra.mxu0 0.0
    %499 = vmatprep.subr.mxu0 0.0
    %500 = vmatpush1.xpose.msra.mxu0 0.0
    %501 = vmatprep.subr.mxu0 0.0
    %502 = vmatpush1.xpose.msra.mxu0 0.0
    %503 = vmatprep.subr.mxu0 0.0
    %504 = vmatpush1.xpose.msra.mxu0 0.0
    %505 = vmatprep.subr.mxu0 0.0
    %506 = vmatpush1.xpose.msra.mxu0 0.0
    %507 = vmatprep.subr.mxu0 0.0
    %508 = vmatpush1.xpose.msra.mxu0 0.0
    %509 = vmatprep.subr.mxu0 0.0
    %510 = vmatpush1.xpose.msra.mxu0 0.0
    %511 = vmatprep.subr.mxu0 0.0
    %512 = vmatpush1.xpose.msra.mxu0 0.0
    %513 = vmatprep.subr.mxu0 0.0
    %514 = vmatpush1.xpose.msra.mxu0 0.0
    %515 = vmatprep.mubr.f32.mxu0 0.0
    %516 = vmatmul.mubr.f32.gmra.mrb[0].mxu0 %v443
    %v517 = vpop.f32.mrb[0].mxu0
    %v518 = vadd.f32 0.0, %v517
    %v519 = vpop.f32.mrb[0].mxu0
    %520 = vmatprep.mubr.f32.mxu0 0.0
    %521 = vmatmul.mubr.f32.gmra.mrb[0].mxu0 %v445
    %v522 = vpop.f32.mrb[0].mxu0
    %v523 = vadd.f32 0.0, %v522
    %v524 = vpop.f32.mrb[0].mxu0
    %525 = vdwg.mxu0
    %v526 = vmul.f32 %v245, 0.17677669
    %v527 = vmul.f32 %v250, 0.17677669
    %v528 = vmul.f32 %v336, 0.17677669
    %v529 = vmul.f32 %v341, 0.17677669
    %v530 = vmul.f32 %v427, 0.17677669
    %v531 = vmul.f32 %v432, 0.17677669
    %v532 = vmul.f32 %v518, 0.17677669
    %v533 = vmul.f32 %v523, 0.17677669
    %v534 = vld [vmem:[%s1] sm:$0xff]
    %v535 = vld [vmem:[%s1 + $0x8] sm:$0xff]
    %v536 = vadd.f32 %v526, %v534
    %v537 = vadd.f32 %v527, %v535
    %v538 = vadd.f32 %v528, %v534
    %v539 = vadd.f32 %v529, %v535
    %v540 = vadd.f32 %v530, %v534
    %v541 = vadd.f32 %v531, %v535
    %v542 = vadd.f32 %v532, %v534
    %v543 = vadd.f32 %v533, %v535
    %vm544 = vcmask 130048
    %v545 = vsel %vm544, %v536, -inf
    %546 = vmax.xlane.f32.xlu0 %v545
    %v547 = vpop.xlane.xlu0 %546
    %v548 = vsel %vm544, %v537, -inf
    %549 = vmax.xlane.f32.xlu0 %v548
    %v550 = vpop.xlane.xlu0 %549
    %v551 = vsel %vm544, %v538, -inf
    %552 = vmax.xlane.f32.xlu0 %v551
    %v553 = vpop.xlane.xlu0 %552
    %v554 = vsel %vm544, %v539, -inf
    %555 = vmax.xlane.f32.xlu0 %v554
    %v556 = vpop.xlane.xlu0 %555
    %v557 = vsel %vm544, %v540, -inf
    %558 = vmax.xlane.f32.xlu0 %v557
    %v559 = vpop.xlane.xlu0 %558
    %v560 = vsel %vm544, %v541, -inf
    %561 = vmax.xlane.f32.xlu0 %v560
    %v562 = vpop.xlane.xlu0 %561
    %v563 = vsel %vm544, %v542, -inf
    %564 = vmax.xlane.f32.xlu0 %v563
    %v565 = vpop.xlane.xlu0 %564
    %v566 = vsel %vm544, %v543, -inf
    %567 = vmax.xlane.f32.xlu0 %v566
    %v568 = vpop.xlane.xlu0 %567
    %v569 = vsub.f32 %v536, %v547
    %v570 = vsub.f32 %v537, %v550
    %v571 = vsub.f32 %v538, %v553
    %v572 = vsub.f32 %v539, %v556
    %v573 = vsub.f32 %v540, %v559
    %v574 = vsub.f32 %v541, %v562
    %v575 = vsub.f32 %v542, %v565
    %v576 = vsub.f32 %v543, %v568
    %v577 = vmul.f32 %v569, 1.442695
    %v578 = vpow.pop %v577
    %v579 = vmul.f32 %v570, 1.442695
    %v580 = vpow.pop %v579
    %v581 = vmul.f32 %v571, 1.442695
    %v582 = vpow.pop %v581
    %v583 = vmul.f32 %v572, 1.442695
    %v584 = vpow.pop %v583
    %v585 = vmul.f32 %v573, 1.442695
    %v586 = vpow.pop %v585
    %v587 = vmul.f32 %v574, 1.442695
    %v588 = vpow.pop %v587
    %v589 = vmul.f32 %v575, 1.442695
    %v590 = vpow.pop %v589
    %v591 = vmul.f32 %v576, 1.442695
    %v592 = vpow.pop %v591
    %v593 = vsel %vm544, %v578, 0.0
    %594 = vadd.xlane.f32.xlu0 %v593
    %v595 = vpop.xlane.xlu0 %594
    %v596 = vsel %vm544, %v580, 0.0
    %597 = vadd.xlane.f32.xlu0 %v596
    %v598 = vpop.xlane.xlu0 %597
    %v599 = vsel %vm544, %v582, 0.0
    %600 = vadd.xlane.f32.xlu0 %v599
    %v601 = vpop.xlane.xlu0 %600
    %v602 = vsel %vm544, %v584, 0.0
    %603 = vadd.xlane.f32.xlu0 %v602
    %v604 = vpop.xlane.xlu0 %603
    %v605 = vsel %vm544, %v586, 0.0
    %606 = vadd.xlane.f32.xlu0 %v605
    %v607 = vpop.xlane.xlu0 %606
    %v608 = vsel %vm544, %v588, 0.0
    %609 = vadd.xlane.f32.xlu0 %v608
    %v610 = vpop.xlane.xlu0 %609
    %v611 = vsel %vm544, %v590, 0.0
    %612 = vadd.xlane.f32.xlu0 %v611
    %v613 = vpop.xlane.xlu0 %612
    %v614 = vsel %vm544, %v592, 0.0
    %615 = vadd.xlane.f32.xlu0 %v614
    %v616 = vpop.xlane.xlu0 %615
    %v617 = vrcp.pop %v595
    %v618 = vrcp.pop %v598
    %v619 = vrcp.pop %v601
    %v620 = vrcp.pop %v604
    %v621 = vrcp.pop %v607
    %v622 = vrcp.pop %v610
    %v623 = vrcp.pop %v613
    %v624 = vrcp.pop %v616
    %v625 = vmul.f32 %v578, %v617
    %v626 = vmul.f32 %v580, %v618
    %v627 = vmul.f32 %v582, %v619
    %v628 = vmul.f32 %v584, %v620
    %v629 = vmul.f32 %v586, %v621
    %v630 = vmul.f32 %v588, %v622
    %v631 = vmul.f32 %v590, %v623
    %v632 = vmul.f32 %v592, %v624
    %v634 = vsel %vm544, %v625, 0
    %v637 = vsel %vm544, %v626, 0
    %639 = vmatprep.subr.mxu0 0.0
    %640 = vmatpush1.msra.mxu0 %v133
    %641 = vmatprep.subr.mxu0 0.0
    %642 = vmatpush1.msra.mxu0 %v138
    %643 = vmatprep.subr.mxu0 0.0
    %644 = vmatpush1.msra.mxu0 0.0
    %645 = vmatprep.subr.mxu0 0.0
    %646 = vmatpush1.msra.mxu0 0.0
    %647 = vmatprep.subr.mxu0 0.0
    %648 = vmatpush1.msra.mxu0 0.0
    %649 = vmatprep.subr.mxu0 0.0
    %650 = vmatpush1.msra.mxu0 0.0
    %651 = vmatprep.subr.mxu0 0.0
    %652 = vmatpush1.msra.mxu0 0.0
    %653 = vmatprep.subr.mxu0 0.0
    %654 = vmatpush1.msra.mxu0 0.0
    %655 = vmatprep.subr.mxu0 0.0
    %656 = vmatpush1.msra.mxu0 0.0
    %657 = vmatprep.subr.mxu0 0.0
    %658 = vmatpush1.msra.mxu0 0.0
    %659 = vmatprep.subr.mxu0 0.0
    %660 = vmatpush1.msra.mxu0 0.0
    %661 = vmatprep.subr.mxu0 0.0
    %662 = vmatpush1.msra.mxu0 0.0
    %663 = vmatprep.subr.mxu0 0.0
    %664 = vmatpush1.msra.mxu0 0.0
    %665 = vmatprep.subr.mxu0 0.0
    %666 = vmatpush1.msra.mxu0 0.0
    %667 = vmatprep.subr.mxu0 0.0
    %668 = vmatpush1.msra.mxu0 0.0
    %669 = vmatprep.subr.mxu0 0.0
    %670 = vmatpush1.msra.mxu0 0.0
    %671 = vmatprep.subr.mxu0 0.0
    %672 = vmatpush1.msra.mxu0 0.0
    %673 = vmatprep.subr.mxu0 0.0
    %674 = vmatpush1.msra.mxu0 0.0
    %675 = vmatprep.subr.mxu0 0.0
    %676 = vmatpush1.msra.mxu0 0.0
    %677 = vmatprep.subr.mxu0 0.0
    %678 = vmatpush1.msra.mxu0 0.0
    %679 = vmatprep.subr.mxu0 0.0
    %680 = vmatpush1.msra.mxu0 0.0
    %681 = vmatprep.subr.mxu0 0.0
    %682 = vmatpush1.msra.mxu0 0.0
    %683 = vmatprep.subr.mxu0 0.0
    %684 = vmatpush1.msra.mxu0 0.0
    %685 = vmatprep.subr.mxu0 0.0
    %686 = vmatpush1.msra.mxu0 0.0
    %687 = vmatprep.subr.mxu0 0.0
    %688 = vmatpush1.msra.mxu0 0.0
    %689 = vmatprep.subr.mxu0 0.0
    %690 = vmatpush1.msra.mxu0 0.0
    %691 = vmatprep.subr.mxu0 0.0
    %692 = vmatpush1.msra.mxu0 0.0
    %693 = vmatprep.subr.mxu0 0.0
    %694 = vmatpush1.msra.mxu0 0.0
    %695 = vmatprep.subr.mxu0 0.0
    %696 = vmatpush1.msra.mxu0 0.0
    %697 = vmatprep.subr.mxu0 0.0
    %698 = vmatpush1.msra.mxu0 0.0
    %699 = vmatprep.subr.mxu0 0.0
    %700 = vmatpush1.msra.mxu0 0.0
    %701 = vmatprep.subr.mxu0 0.0
    %702 = vmatpush1.msra.mxu0 0.0
    %703 = vmatprep.mubr.f32.mxu0 0.0
    %704 = vmatmul.mubr.f32.gmra.mrb[0].mxu0 %v634
    %v705 = vpop.f32.mrb[0].mxu0
    %v706 = vadd.f32 0.0, %v705
    %v707 = vpop.f32.mrb[0].mxu0
    %708 = vmatprep.mubr.f32.mxu0 0.0
    %709 = vmatmul.mubr.f32.gmra.mrb[0].mxu0 %v637
    %v710 = vpop.f32.mrb[0].mxu0
    %v711 = vadd.f32 0.0, %v710
    %v712 = vpop.f32.mrb[0].mxu0
    %713 = vdwg.mxu0
    %v715 = vsel %vm544, %v627, 0
    %v718 = vsel %vm544, %v628, 0
    %720 = vmatprep.subr.mxu0 0.0
    %721 = vmatpush1.msra.mxu0 %v144
    %722 = vmatprep.subr.mxu0 0.0
    %723 = vmatpush1.msra.mxu0 %v146
    %724 = vmatprep.subr.mxu0 0.0
    %725 = vmatpush1.msra.mxu0 0.0
    %726 = vmatprep.subr.mxu0 0.0
    %727 = vmatpush1.msra.mxu0 0.0
    %728 = vmatprep.subr.mxu0 0.0
    %729 = vmatpush1.msra.mxu0 0.0
    %730 = vmatprep.subr.mxu0 0.0
    %731 = vmatpush1.msra.mxu0 0.0
    %732 = vmatprep.subr.mxu0 0.0
    %733 = vmatpush1.msra.mxu0 0.0
    %734 = vmatprep.subr.mxu0 0.0
    %735 = vmatpush1.msra.mxu0 0.0
    %736 = vmatprep.subr.mxu0 0.0
    %737 = vmatpush1.msra.mxu0 0.0
    %738 = vmatprep.subr.mxu0 0.0
    %739 = vmatpush1.msra.mxu0 0.0
    %740 = vmatprep.subr.mxu0 0.0
    %741 = vmatpush1.msra.mxu0 0.0
    %742 = vmatprep.subr.mxu0 0.0
    %743 = vmatpush1.msra.mxu0 0.0
    %744 = vmatprep.subr.mxu0 0.0
    %745 = vmatpush1.msra.mxu0 0.0
    %746 = vmatprep.subr.mxu0 0.0
    %747 = vmatpush1.msra.mxu0 0.0
    %748 = vmatprep.subr.mxu0 0.0
    %749 = vmatpush1.msra.mxu0 0.0
    %750 = vmatprep.subr.mxu0 0.0
    %751 = vmatpush1.msra.mxu0 0.0
    %752 = vmatprep.subr.mxu0 0.0
    %753 = vmatpush1.msra.mxu0 0.0
    %754 = vmatprep.subr.mxu0 0.0
    %755 = vmatpush1.msra.mxu0 0.0
    %756 = vmatprep.subr.mxu0 0.0
    %757 = vmatpush1.msra.mxu0 0.0
    %758 = vmatprep.subr.mxu0 0.0
    %759 = vmatpush1.msra.mxu0 0.0
    %760 = vmatprep.subr.mxu0 0.0
    %761 = vmatpush1.msra.mxu0 0.0
    %762 = vmatprep.subr.mxu0 0.0
    %763 = vmatpush1.msra.mxu0 0.0
    %764 = vmatprep.subr.mxu0 0.0
    %765 = vmatpush1.msra.mxu0 0.0
    %766 = vmatprep.subr.mxu0 0.0
    %767 = vmatpush1.msra.mxu0 0.0
    %768 = vmatprep.subr.mxu0 0.0
    %769 = vmatpush1.msra.mxu0 0.0
    %770 = vmatprep.subr.mxu0 0.0
    %771 = vmatpush1.msra.mxu0 0.0
    %772 = vmatprep.subr.mxu0 0.0
    %773 = vmatpush1.msra.mxu0 0.0
    %774 = vmatprep.subr.mxu0 0.0
    %775 = vmatpush1.msra.mxu0 0.0
    %776 = vmatprep.subr.mxu0 0.0
    %777 = vmatpush1.msra.mxu0 0.0
    %778 = vmatprep.subr.mxu0 0.0
    %779 = vmatpush1.msra.mxu0 0.0
    %780 = vmatprep.subr.mxu0 0.0
    %781 = vmatpush1.msra.mxu0 0.0
    %782 = vmatprep.subr.mxu0 0.0
    %783 = vmatpush1.msra.mxu0 0.0
    %784 = vmatprep.mubr.f32.mxu0 0.0
    %785 = vmatmul.mubr.f32.gmra.mrb[0].mxu0 %v715
    %v786 = vpop.f32.mrb[0].mxu0
    %v787 = vadd.f32 0.0, %v786
    %v788 = vpop.f32.mrb[0].mxu0
    %789 = vmatprep.mubr.f32.mxu0 0.0
    %790 = vmatmul.mubr.f32.gmra.mrb[0].mxu0 %v718
    %v791 = vpop.f32.mrb[0].mxu0
    %v792 = vadd.f32 0.0, %v791
    %v793 = vpop.f32.mrb[0].mxu0
    %794 = vdwg.mxu0
    %v796 = vsel %vm544, %v629, 0
    %v799 = vsel %vm544, %v630, 0
    %801 = vmatprep.subr.mxu0 0.0
    %802 = vmatpush1.msra.mxu0 %v150
    %803 = vmatprep.subr.mxu0 0.0
    %804 = vmatpush1.msra.mxu0 %v152
    %805 = vmatprep.subr.mxu0 0.0
    %806 = vmatpush1.msra.mxu0 0.0
    %807 = vmatprep.subr.mxu0 0.0
    %808 = vmatpush1.msra.mxu0 0.0
    %809 = vmatprep.subr.mxu0 0.0
    %810 = vmatpush1.msra.mxu0 0.0
    %811 = vmatprep.subr.mxu0 0.0
    %812 = vmatpush1.msra.mxu0 0.0
    %813 = vmatprep.subr.mxu0 0.0
    %814 = vmatpush1.msra.mxu0 0.0
    %815 = vmatprep.subr.mxu0 0.0
    %816 = vmatpush1.msra.mxu0 0.0
    %817 = vmatprep.subr.mxu0 0.0
    %818 = vmatpush1.msra.mxu0 0.0
    %819 = vmatprep.subr.mxu0 0.0
    %820 = vmatpush1.msra.mxu0 0.0
    %821 = vmatprep.subr.mxu0 0.0
    %822 = vmatpush1.msra.mxu0 0.0
    %823 = vmatprep.subr.mxu0 0.0
    %824 = vmatpush1.msra.mxu0 0.0
    %825 = vmatprep.subr.mxu0 0.0
    %826 = vmatpush1.msra.mxu0 0.0
    %827 = vmatprep.subr.mxu0 0.0
    %828 = vmatpush1.msra.mxu0 0.0
    %829 = vmatprep.subr.mxu0 0.0
    %830 = vmatpush1.msra.mxu0 0.0
    %831 = vmatprep.subr.mxu0 0.0
    %832 = vmatpush1.msra.mxu0 0.0
    %833 = vmatprep.subr.mxu0 0.0
    %834 = vmatpush1.msra.mxu0 0.0
    %835 = vmatprep.subr.mxu0 0.0
    %836 = vmatpush1.msra.mxu0 0.0
    %837 = vmatprep.subr.mxu0 0.0
    %838 = vmatpush1.msra.mxu0 0.0
    %839 = vmatprep.subr.mxu0 0.0
    %840 = vmatpush1.msra.mxu0 0.0
    %841 = vmatprep.subr.mxu0 0.0
    %842 = vmatpush1.msra.mxu0 0.0
    %843 = vmatprep.subr.mxu0 0.0
    %844 = vmatpush1.msra.mxu0 0.0
    %845 = vmatprep.subr.mxu0 0.0
    %846 = vmatpush1.msra.mxu0 0.0
    %847 = vmatprep.subr.mxu0 0.0
    %848 = vmatpush1.msra.mxu0 0.0
    %849 = vmatprep.subr.mxu0 0.0
    %850 = vmatpush1.msra.mxu0 0.0
    %851 = vmatprep.subr.mxu0 0.0
    %852 = vmatpush1.msra.mxu0 0.0
    %853 = vmatprep.subr.mxu0 0.0
    %854 = vmatpush1.msra.mxu0 0.0
    %855 = vmatprep.subr.mxu0 0.0
    %856 = vmatpush1.msra.mxu0 0.0
    %857 = vmatprep.subr.mxu0 0.0
    %858 = vmatpush1.msra.mxu0 0.0
    %859 = vmatprep.subr.mxu0 0.0
    %860 = vmatpush1.msra.mxu0 0.0
    %861 = vmatprep.subr.mxu0 0.0
    %862 = vmatpush1.msra.mxu0 0.0
    %863 = vmatprep.subr.mxu0 0.0
    %864 = vmatpush1.msra.mxu0 0.0
    %865 = vmatprep.mubr.f32.mxu0 0.0
    %866 = vmatmul.mubr.f32.gmra.mrb[0].mxu0 %v796
    %v867 = vpop.f32.mrb[0].mxu0
    %v868 = vadd.f32 0.0, %v867
    %v869 = vpop.f32.mrb[0].mxu0
    %870 = vmatprep.mubr.f32.mxu0 0.0
    %871 = vmatmul.mubr.f32.gmra.mrb[0].mxu0 %v799
    %v872 = vpop.f32.mrb[0].mxu0
    %v873 = vadd.f32 0.0, %v872
    %v874 = vpop.f32.mrb[0].mxu0
    %875 = vdwg.mxu0
    %v877 = vsel %vm544, %v631, 0
    %v880 = vsel %vm544, %v632, 0
    %882 = vmatprep.subr.mxu0 0.0
    %883 = vmatpush1.msra.mxu0 %v156
    %884 = vmatprep.subr.mxu0 0.0
    %885 = vmatpush1.msra.mxu0 %v158
    %886 = vmatprep.subr.mxu0 0.0
    %887 = vmatpush1.msra.mxu0 0.0
    %888 = vmatprep.subr.mxu0 0.0
    %889 = vmatpush1.msra.mxu0 0.0
    %890 = vmatprep.subr.mxu0 0.0
    %891 = vmatpush1.msra.mxu0 0.0
    %892 = vmatprep.subr.mxu0 0.0
    %893 = vmatpush1.msra.mxu0 0.0
    %894 = vmatprep.subr.mxu0 0.0
    %895 = vmatpush1.msra.mxu0 0.0
    %896 = vmatprep.subr.mxu0 0.0
    %897 = vmatpush1.msra.mxu0 0.0
    %898 = vmatprep.subr.mxu0 0.0
    %899 = vmatpush1.msra.mxu0 0.0
    %900 = vmatprep.subr.mxu0 0.0
    %901 = vmatpush1.msra.mxu0 0.0
    %902 = vmatprep.subr.mxu0 0.0
    %903 = vmatpush1.msra.mxu0 0.0
    %904 = vmatprep.subr.mxu0 0.0
    %905 = vmatpush1.msra.mxu0 0.0
    %906 = vmatprep.subr.mxu0 0.0
    %907 = vmatpush1.msra.mxu0 0.0
    %908 = vmatprep.subr.mxu0 0.0
    %909 = vmatpush1.msra.mxu0 0.0
    %910 = vmatprep.subr.mxu0 0.0
    %911 = vmatpush1.msra.mxu0 0.0
    %912 = vmatprep.subr.mxu0 0.0
    %913 = vmatpush1.msra.mxu0 0.0
    %914 = vmatprep.subr.mxu0 0.0
    %915 = vmatpush1.msra.mxu0 0.0
    %916 = vmatprep.subr.mxu0 0.0
    %917 = vmatpush1.msra.mxu0 0.0
    %918 = vmatprep.subr.mxu0 0.0
    %919 = vmatpush1.msra.mxu0 0.0
    %920 = vmatprep.subr.mxu0 0.0
    %921 = vmatpush1.msra.mxu0 0.0
    %922 = vmatprep.subr.mxu0 0.0
    %923 = vmatpush1.msra.mxu0 0.0
    %924 = vmatprep.subr.mxu0 0.0
    %925 = vmatpush1.msra.mxu0 0.0
    %926 = vmatprep.subr.mxu0 0.0
    %927 = vmatpush1.msra.mxu0 0.0
    %928 = vmatprep.subr.mxu0 0.0
    %929 = vmatpush1.msra.mxu0 0.0
    %930 = vmatprep.subr.mxu0 0.0
    %931 = vmatpush1.msra.mxu0 0.0
    %932 = vmatprep.subr.mxu0 0.0
    %933 = vmatpush1.msra.mxu0 0.0
    %934 = vmatprep.subr.mxu0 0.0
    %935 = vmatpush1.msra.mxu0 0.0
    %936 = vmatprep.subr.mxu0 0.0
    %937 = vmatpush1.msra.mxu0 0.0
    %938 = vmatprep.subr.mxu0 0.0
    %939 = vmatpush1.msra.mxu0 0.0
    %940 = vmatprep.subr.mxu0 0.0
    %941 = vmatpush1.msra.mxu0 0.0
    %942 = vmatprep.subr.mxu0 0.0
    %943 = vmatpush1.msra.mxu0 0.0
    %944 = vmatprep.subr.mxu0 0.0
    %945 = vmatpush1.msra.mxu0 0.0
    %946 = vmatprep.mubr.f32.mxu0 0.0
    %947 = vmatmul.mubr.f32.gmra.mrb[0].mxu0 %v877
    %v948 = vpop.f32.mrb[0].mxu0
    %v949 = vadd.f32 0.0, %v948
    %v950 = vpop.f32.mrb[0].mxu0
    %951 = vmatprep.mubr.f32.mxu0 0.0
    %952 = vmatmul.mubr.f32.gmra.mrb[0].mxu0 %v880
    %v953 = vpop.f32.mrb[0].mxu0
    %v954 = vadd.f32 0.0, %v953
    %v955 = vpop.f32.mrb[0].mxu0
    %956 = vdwg.mxu0
    %v957 = vld [vmem:[%s3] sm:$0xff]
    %v958 = vld [vmem:[%s3 + $0x8] sm:$0xff]
    %v959 = vld [vmem:[%s3 + $0x10] sm:$0xff]
    %v960 = vld [vmem:[%s3 + $0x18] sm:$0xff]
    %v961 = vld [vmem:[%s4] sm:$0x1]
    %v963 = vsel %vm169, %v706, 0
    %v966 = vsel %vm169, %v711, 0
    %968 = vmatprep.subr.mxu0 0.0
    %969 = vmatpush1.msra.mxu0 %v957
    %970 = vmatprep.subr.mxu0 0.0
    %971 = vmatpush1.msra.mxu0 0.0
    %972 = vmatprep.subr.mxu0 0.0
    %973 = vmatpush1.msra.mxu0 0.0
    %974 = vmatprep.subr.mxu0 0.0
    %975 = vmatpush1.msra.mxu0 0.0
    %976 = vmatprep.subr.mxu0 0.0
    %977 = vmatpush1.msra.mxu0 0.0
    %978 = vmatprep.subr.mxu0 0.0
    %979 = vmatpush1.msra.mxu0 0.0
    %980 = vmatprep.subr.mxu0 0.0
    %981 = vmatpush1.msra.mxu0 0.0
    %982 = vmatprep.subr.mxu0 0.0
    %983 = vmatpush1.msra.mxu0 0.0
    %984 = vmatprep.subr.mxu0 0.0
    %985 = vmatpush1.msra.mxu0 0.0
    %986 = vmatprep.subr.mxu0 0.0
    %987 = vmatpush1.msra.mxu0 0.0
    %988 = vmatprep.subr.mxu0 0.0
    %989 = vmatpush1.msra.mxu0 0.0
    %990 = vmatprep.subr.mxu0 0.0
    %991 = vmatpush1.msra.mxu0 0.0
    %992 = vmatprep.subr.mxu0 0.0
    %993 = vmatpush1.msra.mxu0 0.0
    %994 = vmatprep.subr.mxu0 0.0
    %995 = vmatpush1.msra.mxu0 0.0
    %996 = vmatprep.subr.mxu0 0.0
    %997 = vmatpush1.msra.mxu0 0.0
    %998 = vmatprep.subr.mxu0 0.0
    %999 = vmatpush1.msra.mxu0 0.0
    %1000 = vmatprep.subr.mxu0 0.0
    %1001 = vmatpush1.msra.mxu0 0.0
    %1002 = vmatprep.subr.mxu0 0.0
    %1003 = vmatpush1.msra.mxu0 0.0
    %1004 = vmatprep.subr.mxu0 0.0
    %1005 = vmatpush1.msra.mxu0 0.0
    %1006 = vmatprep.subr.mxu0 0.0
    %1007 = vmatpush1.msra.mxu0 0.0
    %1008 = vmatprep.subr.mxu0 0.0
    %1009 = vmatpush1.msra.mxu0 0.0
    %1010 = vmatprep.subr.mxu0 0.0
    %1011 = vmatpush1.msra.mxu0 0.0
    %1012 = vmatprep.subr.mxu0 0.0
    %1013 = vmatpush1.msra.mxu0 0.0
    %1014 = vmatprep.subr.mxu0 0.0
    %1015 = vmatpush1.msra.mxu0 0.0
    %1016 = vmatprep.subr.mxu0 0.0
    %1017 = vmatpush1.msra.mxu0 0.0
    %1018 = vmatprep.subr.mxu0 0.0
    %1019 = vmatpush1.msra.mxu0 0.0
    %1020 = vmatprep.subr.mxu0 0.0
    %1021 = vmatpush1.msra.mxu0 0.0
    %1022 = vmatprep.subr.mxu0 0.0
    %1023 = vmatpush1.msra.mxu0 0.0
    %1024 = vmatprep.subr.mxu0 0.0
    %1025 = vmatpush1.msra.mxu0 0.0
    %1026 = vmatprep.subr.mxu0 0.0
    %1027 = vmatpush1.msra.mxu0 0.0
    %1028 = vmatprep.subr.mxu0 0.0
    %1029 = vmatpush1.msra.mxu0 0.0
    %1030 = vmatprep.subr.mxu0 0.0
    %1031 = vmatpush1.msra.mxu0 0.0
    %1032 = vmatprep.mubr.f32.mxu0 0.0
    %1033 = vmatmul.mubr.f32.gmra.mrb[0].mxu0 %v963
    %v1034 = vpop.f32.mrb[0].mxu0
    %v1035 = vadd.f32 0.0, %v1034
    %v1036 = vpop.f32.mrb[0].mxu0
    %1037 = vmatprep.mubr.f32.mxu0 0.0
    %1038 = vmatmul.mubr.f32.gmra.mrb[0].mxu0 %v966
    %v1039 = vpop.f32.mrb[0].mxu0
    %v1040 = vadd.f32 0.0, %v1039
    %v1041 = vpop.f32.mrb[0].mxu0
    %1042 = vdwg.mxu0
    %v1044 = vlaneseq
    %v1045 = vshrl.u32 %v1044, 7
    %v1046 = vsub.s32 0, %v1045
    %v1047 = vrot.slane %v961, %v1046
    %v1049 = vadd.f32 %v1047, %v1035
    %v1050 = vadd.f32 %v1047, %v1040
    %v1052 = vsel %vm169, %v787, 0
    %v1055 = vsel %vm169, %v792, 0
    %1057 = vmatprep.subr.mxu0 0.0
    %1058 = vmatpush1.msra.mxu0 %v958
    %1059 = vmatprep.subr.mxu0 0.0
    %1060 = vmatpush1.msra.mxu0 0.0
    %1061 = vmatprep.subr.mxu0 0.0
    %1062 = vmatpush1.msra.mxu0 0.0
    %1063 = vmatprep.subr.mxu0 0.0
    %1064 = vmatpush1.msra.mxu0 0.0
    %1065 = vmatprep.subr.mxu0 0.0
    %1066 = vmatpush1.msra.mxu0 0.0
    %1067 = vmatprep.subr.mxu0 0.0
    %1068 = vmatpush1.msra.mxu0 0.0
    %1069 = vmatprep.subr.mxu0 0.0
    %1070 = vmatpush1.msra.mxu0 0.0
    %1071 = vmatprep.subr.mxu0 0.0
    %1072 = vmatpush1.msra.mxu0 0.0
    %1073 = vmatprep.subr.mxu0 0.0
    %1074 = vmatpush1.msra.mxu0 0.0
    %1075 = vmatprep.subr.mxu0 0.0
    %1076 = vmatpush1.msra.mxu0 0.0
    %1077 = vmatprep.subr.mxu0 0.0
    %1078 = vmatpush1.msra.mxu0 0.0
    %1079 = vmatprep.subr.mxu0 0.0
    %1080 = vmatpush1.msra.mxu0 0.0
    %1081 = vmatprep.subr.mxu0 0.0
    %1082 = vmatpush1.msra.mxu0 0.0
    %1083 = vmatprep.subr.mxu0 0.0
    %1084 = vmatpush1.msra.mxu0 0.0
    %1085 = vmatprep.subr.mxu0 0.0
    %1086 = vmatpush1.msra.mxu0 0.0
    %1087 = vmatprep.subr.mxu0 0.0
    %1088 = vmatpush1.msra.mxu0 0.0
    %1089 = vmatprep.subr.mxu0 0.0
    %1090 = vmatpush1.msra.mxu0 0.0
    %1091 = vmatprep.subr.mxu0 0.0
    %1092 = vmatpush1.msra.mxu0 0.0
    %1093 = vmatprep.subr.mxu0 0.0
    %1094 = vmatpush1.msra.mxu0 0.0
    %1095 = vmatprep.subr.mxu0 0.0
    %1096 = vmatpush1.msra.mxu0 0.0
    %1097 = vmatprep.subr.mxu0 0.0
    %1098 = vmatpush1.msra.mxu0 0.0
    %1099 = vmatprep.subr.mxu0 0.0
    %1100 = vmatpush1.msra.mxu0 0.0
    %1101 = vmatprep.subr.mxu0 0.0
    %1102 = vmatpush1.msra.mxu0 0.0
    %1103 = vmatprep.subr.mxu0 0.0
    %1104 = vmatpush1.msra.mxu0 0.0
    %1105 = vmatprep.subr.mxu0 0.0
    %1106 = vmatpush1.msra.mxu0 0.0
    %1107 = vmatprep.subr.mxu0 0.0
    %1108 = vmatpush1.msra.mxu0 0.0
    %1109 = vmatprep.subr.mxu0 0.0
    %1110 = vmatpush1.msra.mxu0 0.0
    %1111 = vmatprep.subr.mxu0 0.0
    %1112 = vmatpush1.msra.mxu0 0.0
    %1113 = vmatprep.subr.mxu0 0.0
    %1114 = vmatpush1.msra.mxu0 0.0
    %1115 = vmatprep.subr.mxu0 0.0
    %1116 = vmatpush1.msra.mxu0 0.0
    %1117 = vmatprep.subr.mxu0 0.0
    %1118 = vmatpush1.msra.mxu0 0.0
    %1119 = vmatprep.subr.mxu0 0.0
    %1120 = vmatpush1.msra.mxu0 0.0
    %1121 = vmatprep.mubr.f32.mxu0 0.0
    %1122 = vmatmul.mubr.f32.gmra.mrb[0].mxu0 %v1052
    %v1123 = vpop.f32.mrb[0].mxu0
    %v1124 = vadd.f32 0.0, %v1123
    %v1125 = vpop.f32.mrb[0].mxu0
    %1126 = vmatprep.mubr.f32.mxu0 0.0
    %1127 = vmatmul.mubr.f32.gmra.mrb[0].mxu0 %v1055
    %v1128 = vpop.f32.mrb[0].mxu0
    %v1129 = vadd.f32 0.0, %v1128
    %v1130 = vpop.f32.mrb[0].mxu0
    %1131 = vdwg.mxu0
    %v1132 = vadd.f32 %v1049, %v1124
    %v1133 = vadd.f32 %v1050, %v1129
    %v1135 = vsel %vm169, %v868, 0
    %v1138 = vsel %vm169, %v873, 0
    %1140 = vmatprep.subr.mxu0 0.0
    %1141 = vmatpush1.msra.mxu0 %v959
    %1142 = vmatprep.subr.mxu0 0.0
    %1143 = vmatpush1.msra.mxu0 0.0
    %1144 = vmatprep.subr.mxu0 0.0
    %1145 = vmatpush1.msra.mxu0 0.0
    %1146 = vmatprep.subr.mxu0 0.0
    %1147 = vmatpush1.msra.mxu0 0.0
    %1148 = vmatprep.subr.mxu0 0.0
    %1149 = vmatpush1.msra.mxu0 0.0
    %1150 = vmatprep.subr.mxu0 0.0
    %1151 = vmatpush1.msra.mxu0 0.0
    %1152 = vmatprep.subr.mxu0 0.0
    %1153 = vmatpush1.msra.mxu0 0.0
    %1154 = vmatprep.subr.mxu0 0.0
    %1155 = vmatpush1.msra.mxu0 0.0
    %1156 = vmatprep.subr.mxu0 0.0
    %1157 = vmatpush1.msra.mxu0 0.0
    %1158 = vmatprep.subr.mxu0 0.0
    %1159 = vmatpush1.msra.mxu0 0.0
    %1160 = vmatprep.subr.mxu0 0.0
    %1161 = vmatpush1.msra.mxu0 0.0
    %1162 = vmatprep.subr.mxu0 0.0
    %1163 = vmatpush1.msra.mxu0 0.0
    %1164 = vmatprep.subr.mxu0 0.0
    %1165 = vmatpush1.msra.mxu0 0.0
    %1166 = vmatprep.subr.mxu0 0.0
    %1167 = vmatpush1.msra.mxu0 0.0
    %1168 = vmatprep.subr.mxu0 0.0
    %1169 = vmatpush1.msra.mxu0 0.0
    %1170 = vmatprep.subr.mxu0 0.0
    %1171 = vmatpush1.msra.mxu0 0.0
    %1172 = vmatprep.subr.mxu0 0.0
    %1173 = vmatpush1.msra.mxu0 0.0
    %1174 = vmatprep.subr.mxu0 0.0
    %1175 = vmatpush1.msra.mxu0 0.0
    %1176 = vmatprep.subr.mxu0 0.0
    %1177 = vmatpush1.msra.mxu0 0.0
    %1178 = vmatprep.subr.mxu0 0.0
    %1179 = vmatpush1.msra.mxu0 0.0
    %1180 = vmatprep.subr.mxu0 0.0
    %1181 = vmatpush1.msra.mxu0 0.0
    %1182 = vmatprep.subr.mxu0 0.0
    %1183 = vmatpush1.msra.mxu0 0.0
    %1184 = vmatprep.subr.mxu0 0.0
    %1185 = vmatpush1.msra.mxu0 0.0
    %1186 = vmatprep.subr.mxu0 0.0
    %1187 = vmatpush1.msra.mxu0 0.0
    %1188 = vmatprep.subr.mxu0 0.0
    %1189 = vmatpush1.msra.mxu0 0.0
    %1190 = vmatprep.subr.mxu0 0.0
    %1191 = vmatpush1.msra.mxu0 0.0
    %1192 = vmatprep.subr.mxu0 0.0
    %1193 = vmatpush1.msra.mxu0 0.0
    %1194 = vmatprep.subr.mxu0 0.0
    %1195 = vmatpush1.msra.mxu0 0.0
    %1196 = vmatprep.subr.mxu0 0.0
    %1197 = vmatpush1.msra.mxu0 0.0
    %1198 = vmatprep.subr.mxu0 0.0
    %1199 = vmatpush1.msra.mxu0 0.0
    %1200 = vmatprep.subr.mxu0 0.0
    %1201 = vmatpush1.msra.mxu0 0.0
    %1202 = vmatprep.subr.mxu0 0.0
    %1203 = vmatpush1.msra.mxu0 0.0
    %1204 = vmatprep.mubr.f32.mxu0 0.0
    %1205 = vmatmul.mubr.f32.gmra.mrb[0].mxu0 %v1135
    %v1206 = vpop.f32.mrb[0].mxu0
    %v1207 = vadd.f32 0.0, %v1206
    %v1208 = vpop.f32.mrb[0].mxu0
    %1209 = vmatprep.mubr.f32.mxu0 0.0
    %1210 = vmatmul.mubr.f32.gmra.mrb[0].mxu0 %v1138
    %v1211 = vpop.f32.mrb[0].mxu0
    %v1212 = vadd.f32 0.0, %v1211
    %v1213 = vpop.f32.mrb[0].mxu0
    %1214 = vdwg.mxu0
    %v1215 = vadd.f32 %v1132, %v1207
    %v1216 = vadd.f32 %v1133, %v1212
    %v1218 = vsel %vm169, %v949, 0
    %v1221 = vsel %vm169, %v954, 0
    %1223 = vmatprep.subr.mxu0 0.0
    %1224 = vmatpush1.msra.mxu0 %v960
    %1225 = vmatprep.subr.mxu0 0.0
    %1226 = vmatpush1.msra.mxu0 0.0
    %1227 = vmatprep.subr.mxu0 0.0
    %1228 = vmatpush1.msra.mxu0 0.0
    %1229 = vmatprep.subr.mxu0 0.0
    %1230 = vmatpush1.msra.mxu0 0.0
    %1231 = vmatprep.subr.mxu0 0.0
    %1232 = vmatpush1.msra.mxu0 0.0
    %1233 = vmatprep.subr.mxu0 0.0
    %1234 = vmatpush1.msra.mxu0 0.0
    %1235 = vmatprep.subr.mxu0 0.0
    %1236 = vmatpush1.msra.mxu0 0.0
    %1237 = vmatprep.subr.mxu0 0.0
    %1238 = vmatpush1.msra.mxu0 0.0
    %1239 = vmatprep.subr.mxu0 0.0
    %1240 = vmatpush1.msra.mxu0 0.0
    %1241 = vmatprep.subr.mxu0 0.0
    %1242 = vmatpush1.msra.mxu0 0.0
    %1243 = vmatprep.subr.mxu0 0.0
    %1244 = vmatpush1.msra.mxu0 0.0
    %1245 = vmatprep.subr.mxu0 0.0
    %1246 = vmatpush1.msra.mxu0 0.0
    %1247 = vmatprep.subr.mxu0 0.0
    %1248 = vmatpush1.msra.mxu0 0.0
    %1249 = vmatprep.subr.mxu0 0.0
    %1250 = vmatpush1.msra.mxu0 0.0
    %1251 = vmatprep.subr.mxu0 0.0
    %1252 = vmatpush1.msra.mxu0 0.0
    %1253 = vmatprep.subr.mxu0 0.0
    %1254 = vmatpush1.msra.mxu0 0.0
    %1255 = vmatprep.subr.mxu0 0.0
    %1256 = vmatpush1.msra.mxu0 0.0
    %1257 = vmatprep.subr.mxu0 0.0
    %1258 = vmatpush1.msra.mxu0 0.0
    %1259 = vmatprep.subr.mxu0 0.0
    %1260 = vmatpush1.msra.mxu0 0.0
    %1261 = vmatprep.subr.mxu0 0.0
    %1262 = vmatpush1.msra.mxu0 0.0
    %1263 = vmatprep.subr.mxu0 0.0
    %1264 = vmatpush1.msra.mxu0 0.0
    %1265 = vmatprep.subr.mxu0 0.0
    %1266 = vmatpush1.msra.mxu0 0.0
    %1267 = vmatprep.subr.mxu0 0.0
    %1268 = vmatpush1.msra.mxu0 0.0
    %1269 = vmatprep.subr.mxu0 0.0
    %1270 = vmatpush1.msra.mxu0 0.0
    %1271 = vmatprep.subr.mxu0 0.0
    %1272 = vmatpush1.msra.mxu0 0.0
    %1273 = vmatprep.subr.mxu0 0.0
    %1274 = vmatpush1.msra.mxu0 0.0
    %1275 = vmatprep.subr.mxu0 0.0
    %1276 = vmatpush1.msra.mxu0 0.0
    %1277 = vmatprep.subr.mxu0 0.0
    %1278 = vmatpush1.msra.mxu0 0.0
    %1279 = vmatprep.subr.mxu0 0.0
    %1280 = vmatpush1.msra.mxu0 0.0
    %1281 = vmatprep.subr.mxu0 0.0
    %1282 = vmatpush1.msra.mxu0 0.0
    %1283 = vmatprep.subr.mxu0 0.0
    %1284 = vmatpush1.msra.mxu0 0.0
    %1285 = vmatprep.subr.mxu0 0.0
    %1286 = vmatpush1.msra.mxu0 0.0
    %1287 = vmatprep.mubr.f32.mxu0 0.0
    %1288 = vmatmul.mubr.f32.gmra.mrb[0].mxu0 %v1218
    %v1289 = vpop.f32.mrb[0].mxu0
    %v1290 = vadd.f32 0.0, %v1289
    %v1291 = vpop.f32.mrb[0].mxu0
    %1292 = vmatprep.mubr.f32.mxu0 0.0
    %1293 = vmatmul.mubr.f32.gmra.mrb[0].mxu0 %v1221
    %v1294 = vpop.f32.mrb[0].mxu0
    %v1295 = vadd.f32 0.0, %v1294
    %v1296 = vpop.f32.mrb[0].mxu0
    %1297 = vdwg.mxu0
    %v1298 = vadd.f32 %v1215, %v1290
    %v1299 = vadd.f32 %v1216, %v1295
    %1300 = vrot.lane.b32.xlu0 %v45, 64
    %v1301 = vpop.permute.xlu0 %1300
    %1302 = vrot.lane.b32.xlu0 %v46, 64
    %v1303 = vpop.permute.xlu0 %1302
    %v1306 = vadd.f32 %v1298, %v1301
    %v1307 = vadd.f32 %v1299, %v1303
    %vm1308 = vcmask 261120
    %v1309 = vsel %vm1308, %v1306, 0.0
    %1310 = vadd.xlane.f32.xlu0 %v1309
    %v1311 = vpop.xlane.xlu0 %1310
    %v1312 = vsel %vm1308, %v1307, 0.0
    %1313 = vadd.xlane.f32.xlu0 %v1312
    %v1314 = vpop.xlane.xlu0 %1313
    %v1315 = vrcp.pop 32.0
    %v1316 = vmul.f32 %v1311, %v1315
    %v1317 = vmul.f32 %v1314, %v1315
    %v1318 = vsub.f32 %v1306, %v1316
    %v1319 = vsub.f32 %v1307, %v1317
    %v1320 = vmul.f32 %v1318, %v1318
    %v1321 = vmul.f32 %v1319, %v1319
    %v1322 = vsel %vm1308, %v1320, 0.0
    %1323 = vadd.xlane.f32.xlu0 %v1322
    %v1324 = vpop.xlane.xlu0 %1323
    %v1325 = vsel %vm1308, %v1321, 0.0
    %1326 = vadd.xlane.f32.xlu0 %v1325
    %v1327 = vpop.xlane.xlu0 %1326
    %v1328 = vmul.f32 %v1324, %v1315
    %v1329 = vmul.f32 %v1327, %v1315
    %v1330 = vadd.f32 %v1328, 1e-05
    %v1331 = vadd.f32 %v1329, 1e-05
    %v1332 = vrsqrt.pop %v1330
    %v1333 = vrsqrt.pop %v1331
    %v1334 = vmul.f32 %v1318, %v1332
    %v1335 = vmul.f32 %v1319, %v1333
    %v1336 = vld [vmem:[%s5] sm:$0x1]
    %v1338 = vlaneseq
    %v1339 = vshrl.u32 %v1338, 7
    %v1340 = vsub.s32 0, %v1339
    %v1341 = vrot.slane %v1336, %v1340
    %v1343 = vmul.f32 %v1334, %v1341
    %v1344 = vmul.f32 %v1335, %v1341
    %v1345 = vld [vmem:[%s6] sm:$0x1]
    %v1347 = vlaneseq
    %v1348 = vshrl.u32 %v1347, 7
    %v1349 = vsub.s32 0, %v1348
    %v1350 = vrot.slane %v1345, %v1349
    %v1352 = vadd.f32 %v1343, %v1350
    %v1353 = vadd.f32 %v1344, %v1350
    %v1354 = vld [vmem:[%s7] sm:$0xff]
    %v1355 = vld [vmem:[%s7 + $0x8] sm:$0xff]
    %v1356 = vld [vmem:[%s7 + $0x10] sm:$0xff]
    %v1357 = vld [vmem:[%s7 + $0x18] sm:$0xff]
    %v1358 = vld [vmem:[%s8] sm:$0x1]
    %v1360 = vlaneseq
    %v1361 = vshrl.u32 %v1360, 7
    %v1362 = vsub.s32 0, %v1361
    %v1363 = vrot.slane %v1358, %v1362
    %v1366 = vsel %vm1308, %v1352, 0
    %v1369 = vsel %vm1308, %v1353, 0
    %1371 = vmatprep.subr.mxu0 0.0
    %1372 = vmatpush1.msra.mxu0 %v1354
    %1373 = vmatprep.subr.mxu0 0.0
    %1374 = vmatpush1.msra.mxu0 %v1355
    %1375 = vmatprep.subr.mxu0 0.0
    %1376 = vmatpush1.msra.mxu0 %v1356
    %1377 = vmatprep.subr.mxu0 0.0
    %1378 = vmatpush1.msra.mxu0 %v1357
    %1379 = vmatprep.subr.mxu0 0.0
    %1380 = vmatpush1.msra.mxu0 0.0
    %1381 = vmatprep.subr.mxu0 0.0
    %1382 = vmatpush1.msra.mxu0 0.0
    %1383 = vmatprep.subr.mxu0 0.0
    %1384 = vmatpush1.msra.mxu0 0.0
    %1385 = vmatprep.subr.mxu0 0.0
    %1386 = vmatpush1.msra.mxu0 0.0
    %1387 = vmatprep.subr.mxu0 0.0
    %1388 = vmatpush1.msra.mxu0 0.0
    %1389 = vmatprep.subr.mxu0 0.0
    %1390 = vmatpush1.msra.mxu0 0.0
    %1391 = vmatprep.subr.mxu0 0.0
    %1392 = vmatpush1.msra.mxu0 0.0
    %1393 = vmatprep.subr.mxu0 0.0
    %1394 = vmatpush1.msra.mxu0 0.0
    %1395 = vmatprep.subr.mxu0 0.0
    %1396 = vmatpush1.msra.mxu0 0.0
    %1397 = vmatprep.subr.mxu0 0.0
    %1398 = vmatpush1.msra.mxu0 0.0
    %1399 = vmatprep.subr.mxu0 0.0
    %1400 = vmatpush1.msra.mxu0 0.0
    %1401 = vmatprep.subr.mxu0 0.0
    %1402 = vmatpush1.msra.mxu0 0.0
    %1403 = vmatprep.subr.mxu0 0.0
    %1404 = vmatpush1.msra.mxu0 0.0
    %1405 = vmatprep.subr.mxu0 0.0
    %1406 = vmatpush1.msra.mxu0 0.0
    %1407 = vmatprep.subr.mxu0 0.0
    %1408 = vmatpush1.msra.mxu0 0.0
    %1409 = vmatprep.subr.mxu0 0.0
    %1410 = vmatpush1.msra.mxu0 0.0
    %1411 = vmatprep.subr.mxu0 0.0
    %1412 = vmatpush1.msra.mxu0 0.0
    %1413 = vmatprep.subr.mxu0 0.0
    %1414 = vmatpush1.msra.mxu0 0.0
    %1415 = vmatprep.subr.mxu0 0.0
    %1416 = vmatpush1.msra.mxu0 0.0
    %1417 = vmatprep.subr.mxu0 0.0
    %1418 = vmatpush1.msra.mxu0 0.0
    %1419 = vmatprep.subr.mxu0 0.0
    %1420 = vmatpush1.msra.mxu0 0.0
    %1421 = vmatprep.subr.mxu0 0.0
    %1422 = vmatpush1.msra.mxu0 0.0
    %1423 = vmatprep.subr.mxu0 0.0
    %1424 = vmatpush1.msra.mxu0 0.0
    %1425 = vmatprep.subr.mxu0 0.0
    %1426 = vmatpush1.msra.mxu0 0.0
    %1427 = vmatprep.subr.mxu0 0.0
    %1428 = vmatpush1.msra.mxu0 0.0
    %1429 = vmatprep.subr.mxu0 0.0
    %1430 = vmatpush1.msra.mxu0 0.0
    %1431 = vmatprep.subr.mxu0 0.0
    %1432 = vmatpush1.msra.mxu0 0.0
    %1433 = vmatprep.subr.mxu0 0.0
    %1434 = vmatpush1.msra.mxu0 0.0
    %1435 = vmatprep.mubr.f32.mxu0 0.0
    %1436 = vmatmul.mubr.f32.gmra.mrb[0].mxu0 %v1366
    %v1437 = vpop.f32.mrb[0].mxu0
    %v1438 = vadd.f32 %v1363, %v1437
    %v1439 = vpop.f32.mrb[0].mxu0
    %1440 = vmatprep.mubr.f32.mxu0 0.0
    %1441 = vmatmul.mubr.f32.gmra.mrb[0].mxu0 %v1369
    %v1442 = vpop.f32.mrb[0].mxu0
    %v1443 = vadd.f32 %v1363, %v1442
    %v1444 = vpop.f32.mrb[0].mxu0
    %1445 = vdwg.mxu0
    %v1446 = vmax.f32 %v1438, 0.0
    %v1447 = vmax.f32 %v1443, 0.0
    %v1448 = vld [vmem:[%s9] sm:$0xff]
    %v1449 = vld [vmem:[%s9 + $0x8] sm:$0xff]
    %v1450 = vld [vmem:[%s9 + $0x10] sm:$0xff]
    %v1451 = vld [vmem:[%s9 + $0x18] sm:$0xff]
    %v1452 = vld [vmem:[%s9 + $0x20] sm:$0xff]
    %v1453 = vld [vmem:[%s9 + $0x28] sm:$0xff]
    %v1454 = vld [vmem:[%s9 + $0x30] sm:$0xff]
    %v1455 = vld [vmem:[%s9 + $0x38] sm:$0xff]
    %v1456 = vld [vmem:[%s9 + $0x40] sm:$0xff]
    %v1457 = vld [vmem:[%s9 + $0x48] sm:$0xff]
    %v1458 = vld [vmem:[%s9 + $0x50] sm:$0xff]
    %v1459 = vld [vmem:[%s9 + $0x58] sm:$0xff]
    %v1460 = vld [vmem:[%s9 + $0x60] sm:$0xff]
    %v1461 = vld [vmem:[%s9 + $0x68] sm:$0xff]
    %v1462 = vld [vmem:[%s9 + $0x70] sm:$0xff]
    %v1463 = vld [vmem:[%s9 + $0x78] sm:$0xff]
    %v1464 = vld [vmem:[%s10] sm:$0x1]
    %v1466 = vlaneseq
    %v1467 = vshrl.u32 %v1466, 7
    %v1468 = vsub.s32 0, %v1467
    %v1469 = vrot.slane %v1464, %v1468
    %1471 = vmatprep.subr.mxu0 0.0
    %1472 = vmatpush1.msra.mxu0 %v1448
    %1473 = vmatprep.subr.mxu0 0.0
    %1474 = vmatpush1.msra.mxu0 %v1449
    %1475 = vmatprep.subr.mxu0 0.0
    %1476 = vmatpush1.msra.mxu0 %v1450
    %1477 = vmatprep.subr.mxu0 0.0
    %1478 = vmatpush1.msra.mxu0 %v1451
    %1479 = vmatprep.subr.mxu0 0.0
    %1480 = vmatpush1.msra.mxu0 %v1452
    %1481 = vmatprep.subr.mxu0 0.0
    %1482 = vmatpush1.msra.mxu0 %v1453
    %1483 = vmatprep.subr.mxu0 0.0
    %1484 = vmatpush1.msra.mxu0 %v1454
    %1485 = vmatprep.subr.mxu0 0.0
    %1486 = vmatpush1.msra.mxu0 %v1455
    %1487 = vmatprep.subr.mxu0 0.0
    %1488 = vmatpush1.msra.mxu0 %v1456
    %1489 = vmatprep.subr.mxu0 0.0
    %1490 = vmatpush1.msra.mxu0 %v1457
    %1491 = vmatprep.subr.mxu0 0.0
    %1492 = vmatpush1.msra.mxu0 %v1458
    %1493 = vmatprep.subr.mxu0 0.0
    %1494 = vmatpush1.msra.mxu0 %v1459
    %1495 = vmatprep.subr.mxu0 0.0
    %1496 = vmatpush1.msra.mxu0 %v1460
    %1497 = vmatprep.subr.mxu0 0.0
    %1498 = vmatpush1.msra.mxu0 %v1461
    %1499 = vmatprep.subr.mxu0 0.0
    %1500 = vmatpush1.msra.mxu0 %v1462
    %1501 = vmatprep.subr.mxu0 0.0
    %1502 = vmatpush1.msra.mxu0 %v1463
    %1503 = vmatprep.subr.mxu0 0.0
    %1504 = vmatpush1.msra.mxu0 0.0
    %1505 = vmatprep.subr.mxu0 0.0
    %1506 = vmatpush1.msra.mxu0 0.0
    %1507 = vmatprep.subr.mxu0 0.0
    %1508 = vmatpush1.msra.mxu0 0.0
    %1509 = vmatprep.subr.mxu0 0.0
    %1510 = vmatpush1.msra.mxu0 0.0
    %1511 = vmatprep.subr.mxu0 0.0
    %1512 = vmatpush1.msra.mxu0 0.0
    %1513 = vmatprep.subr.mxu0 0.0
    %1514 = vmatpush1.msra.mxu0 0.0
    %1515 = vmatprep.subr.mxu0 0.0
    %1516 = vmatpush1.msra.mxu0 0.0
    %1517 = vmatprep.subr.mxu0 0.0
    %1518 = vmatpush1.msra.mxu0 0.0
    %1519 = vmatprep.subr.mxu0 0.0
    %1520 = vmatpush1.msra.mxu0 0.0
    %1521 = vmatprep.subr.mxu0 0.0
    %1522 = vmatpush1.msra.mxu0 0.0
    %1523 = vmatprep.subr.mxu0 0.0
    %1524 = vmatpush1.msra.mxu0 0.0
    %1525 = vmatprep.subr.mxu0 0.0
    %1526 = vmatpush1.msra.mxu0 0.0
    %1527 = vmatprep.subr.mxu0 0.0
    %1528 = vmatpush1.msra.mxu0 0.0
    %1529 = vmatprep.subr.mxu0 0.0
    %1530 = vmatpush1.msra.mxu0 0.0
    %1531 = vmatprep.subr.mxu0 0.0
    %1532 = vmatpush1.msra.mxu0 0.0
    %1533 = vmatprep.subr.mxu0 0.0
    %1534 = vmatpush1.msra.mxu0 0.0
    %1535 = vmatprep.mubr.f32.mxu0 0.0
    %1536 = vmatmul.mubr.f32.gmra.mrb[0].mxu0 %v1446
    %v1537 = vpop.f32.mrb[0].mxu0
    %v1538 = vadd.f32 %v1469, %v1537
    %v1539 = vpop.f32.mrb[0].mxu0
    %1540 = vmatprep.mubr.f32.mxu0 0.0
    %1541 = vmatmul.mubr.f32.gmra.mrb[0].mxu0 %v1447
    %v1542 = vpop.f32.mrb[0].mxu0
    %v1543 = vadd.f32 %v1469, %v1542
    %v1544 = vpop.f32.mrb[0].mxu0
    %1545 = vdwg.mxu0
    %v1546 = vadd.f32 %v1538, %v1352
    %v1547 = vadd.f32 %v1543, %v1353
    %v1548 = vsel %vm1308, %v1546, 0.0
    %1549 = vadd.xlane.f32.xlu0 %v1548
    %v1550 = vpop.xlane.xlu0 %1549
    %v1551 = vsel %vm1308, %v1547, 0.0
    %1552 = vadd.xlane.f32.xlu0 %v1551
    %v1553 = vpop.xlane.xlu0 %1552
    %v1554 = vmul.f32 %v1550, %v1315
    %v1555 = vmul.f32 %v1553, %v1315
    %v1556 = vsub.f32 %v1546, %v1554
    %v1557 = vsub.f32 %v1547, %v1555
    %v1558 = vmul.f32 %v1556, %v1556
    %v1559 = vmul.f32 %v1557, %v1557
    %v1560 = vsel %vm1308, %v1558, 0.0
    %1561 = vadd.xlane.f32.xlu0 %v1560
    %v1562 = vpop.xlane.xlu0 %1561
    %v1563 = vsel %vm1308, %v1559, 0.0
    %1564 = vadd.xlane.f32.xlu0 %v1563
    %v1565 = vpop.xlane.xlu0 %1564
    %v1566 = vmul.f32 %v1562, %v1315
    %v1567 = vmul.f32 %v1565, %v1315
    %v1568 = vadd.f32 %v1566, 1e-05
    %v1569 = vadd.f32 %v1567, 1e-05
    %v1570 = vrsqrt.pop %v1568
    %v1571 = vrsqrt.pop %v1569
    %v1572 = vmul.f32 %v1556, %v1570
    %v1573 = vmul.f32 %v1557, %v1571
    %v1574 = vld [vmem:[%s11] sm:$0x1]
    %v1576 = vlaneseq
    %v1577 = vshrl.u32 %v1576, 7
    %v1578 = vsub.s32 0, %v1577
    %v1579 = vrot.slane %v1574, %v1578
    %v1581 = vmul.f32 %v1572, %v1579
    %v1582 = vmul.f32 %v1573, %v1579
    %v1583 = vld [vmem:[%s12] sm:$0x1]
    %v1585 = vlaneseq
    %v1586 = vshrl.u32 %v1585, 7
    %v1587 = vsub.s32 0, %v1586
    %v1588 = vrot.slane %v1583, %v1587
    %v1590 = vadd.f32 %v1581, %v1588
    %v1591 = vadd.f32 %v1582, %v1588
    %1592 = vst.msk [vmem:[#allocation2] sm:$0xff] %vm1308, %v1590
    %1593 = vst.msk [vmem:[#allocation2 + $0x8] sm:$0xff] %vm1308, %v1591
    // Predicated region
    $region54: #{transformer_block.1} parent=1 // pred_check
      _
    $region55: #{transformer_block.1} parent=1 // pred_check_branch
      %1595 = sbr.rel (0) target = $region57
    $region56: #{transformer_block.1} parent=1 // pred_region
      %s1597 = ssub.s32 256, 256
      %1598 = vsyncadd [#allocation3], %s1597
      %s1599 = sshll.u32 [#allocation2], 4
      %s1600 = int_to_ptr.vmem [resolvable:$true] %s1599
      %1605 = dma.vmem_to_hbm [thread:$0]  %s1600, 256, %s13, [#allocation3], 128, 128, 8
    $region57: #{transformer_block.1} parent=1 // pred_fallthru
      _
    // Predicated region
    $region58: #{transformer_block.1} parent=1 // pred_check
      _
    $region59: #{transformer_block.1} parent=1 // pred_check_branch
      %1607 = sbr.rel (0) target = $region61
    $region60: #{transformer_block.1} parent=1 // pred_region
      %1608 = dma.done [#allocation3], 256
    $region61: #{transformer_block.1} parent=1 // pred_fallthru
      _
    %1609 = vsyncpa [#allocation3], 1

</llo_original>
